<compile_context>
chip_gen: v7x
topology: tpu7x:2x2x1
jax: 0.10.0
libtpu: 0.0.40
codegen_flags: <defaults>
</compile_context>

<pallas_src>
import jax
import jax.numpy as jnp
from jax.experimental import pallas as pl
from jax.experimental.pallas import tpu as pltpu

# Hyper-parameters from the PyTorch spec.
INPUT_SIZE = 10
HIDDEN_SIZE = 256
OUTPUT_SIZE = 2
BATCH = 64
SEQ_LEN = 8           # small demo sequence length


def rnn_seq_kernel(xw_ref, h0_ref, w_h_ref, h_seq_ref, h_ref):
    """One (batch_block, time_block) grid cell of the Elman RNN recurrence.

    Grid = (nb, nt); axis 0 "parallel" (batch), axis 1 "arbitrary" (time blocks).
    xw_ref   : (block_t, bb, H) f32   precomputed x @ W_x + b_ih   (streamed)
    h0_ref   : (bb, H)          f32   initial hidden (read only at the first block)
    w_h_ref  : (H, H)           bf16  recurrent weight (constant index -> VMEM resident)
    h_seq_ref: (block_t, bb, H) bf16  per-step hidden sequence (for the deferred h2o GEMM)
    h_ref    : (bb, H)          f32   h_final output; constant index along the time
                                      axis -> VMEM-resident hidden-state carry.
    """
    tb = pl.program_id(1)

    @pl.when(tb == 0)
    def _init():
        h_ref[...] = h0_ref[...]

    w_h = w_h_ref[...]
    block_t = xw_ref.shape[0]

    def step(t, h):
        # hidden = i2h(cat(x, h)) == (x @ W_x + b_ih) + h @ W_h ; the x-part was
        # precomputed outside the kernel.  bf16 MXU inputs, f32 accumulation,
        # f32 carry across steps.
        hidden = xw_ref[t] + jnp.dot(h.astype(jnp.bfloat16), w_h,
                                     preferred_element_type=jnp.float32)
        # TODO(synk): nn.Dropout(p=0.5) is identity in eval mode; training-mode
        # masking would use pltpu.prng_seed + pltpu.prng_random_bits here.
        h_seq_ref[t] = hidden.astype(h_seq_ref.dtype)
        return hidden

    h_ref[...] = jax.lax.fori_loop(0, block_t, step, h_ref[...], unroll=True)


def prepare_params(w_i2h, b_i2h, w_h2o, b_h2o, input_size):
    """Split the PyTorch-layout i2h weight ONCE (outside the hot path).

    w_i2h : (input_size + hidden, hidden)  -- pre-transposed nn.Linear weight
    Returns (w_x f32, w_h bf16, b_ih f32, w_ho f32, b_ho f32).  Only the
    in-kernel recurrent weight is bf16 (native MXU path); the hoisted one-shot
    XLA GEMM weights stay f32.
    """
    w_x = jnp.asarray(w_i2h[:input_size, :], jnp.float32)
    w_h = jnp.asarray(w_i2h[input_size:, :], jnp.bfloat16)
    b_ih = jnp.asarray(b_i2h, jnp.float32)
    w_ho = jnp.asarray(w_h2o, jnp.float32)
    b_ho = jnp.asarray(b_h2o, jnp.float32)
    return w_x, w_h, b_ih, w_ho, b_ho


def rnn_forward_seq(x_seq, h0, w_x, w_h, b_ih, w_ho, b_ho, *,
                    block_b=None, block_t=None):
    """Run the RNN cell over a whole sequence.

    x_seq : (T, B, input_size)    h0 : (B, hidden)
    Returns (outputs (T, B, out_size), final hidden (B, hidden)).

    block_b: batch tile. Default = B (single block) -- best on single-TC
             v5e / v6e.  On v7x pass B // 2 so the "parallel" batch axis
             shards across the two TensorCores.
    block_t: timesteps per grid cell. Default = T (time grid collapsed);
             lower it only if (block_t, B, hidden) tiles no longer fit VMEM.
    """
    T, B, _ = x_seq.shape
    H = w_h.shape[0]
    bb = B if block_b is None else min(block_b, B)
    bt = T if block_t is None else min(block_t, T)
    assert B % bb == 0 and T % bt == 0, "batch/seq must be divisible by tiles"
    nb, nt = B // bb, T // bt

    # Hoisted input GEMM (cuDNN-RNN style): one (T*B, in) @ (in, H) matmul with
    # full M occupancy; b_ih folded in so the kernel has no per-step bias add.
    xw = jnp.einsum("tbi,ih->tbh", x_seq, w_x,
                    preferred_element_type=jnp.float32) + b_ih

    h_seq, h_final = pl.pallas_call(
        rnn_seq_kernel,
        out_shape=(
            jax.ShapeDtypeStruct((T, B, H), jnp.bfloat16),
            jax.ShapeDtypeStruct((B, H), jnp.float32),
        ),
        grid=(nb, nt),
        in_specs=[
            pl.BlockSpec((bt, bb, H), lambda b, t: (t, b, 0)),   # xw (streamed)
            pl.BlockSpec((bb, H), lambda b, t: (b, 0)),          # h0
            # W_h: constant index_map -> DMA'd once, VMEM-resident.
            # (pipeline_mode=pl.Buffered(1) would single-buffer it at large hidden.)
            pl.BlockSpec((H, H), lambda b, t: (0, 0)),
        ],
        out_specs=(
            pl.BlockSpec((bt, bb, H), lambda b, t: (t, b, 0)),   # hidden sequence
            pl.BlockSpec((bb, H), lambda b, t: (b, 0)),          # h_final (carry)
        ),
        # alias the incoming hidden with h_final: no extra HBM buffer / copy.
        input_output_aliases={1: 1},
        compiler_params=pltpu.CompilerParams(
            dimension_semantics=("parallel", "arbitrary"),
            # TODO(synk): raise vmem_limit_bytes here before scaling HIDDEN_SIZE
            # on v7x (64 MiB VMEM, 32 MiB default scoped limit).
        ),
    )(xw, h0, w_h)

    # Hoisted output GEMM: one (T*B, H) @ (H, out) matmul + bias in XLA with full
    # MXU occupancy (replaces the per-step 98%-zero-lane h2o matmul).
    out_seq = jnp.einsum("tbh,ho->tbo", h_seq.astype(jnp.float32), w_ho,
                         preferred_element_type=jnp.float32) + b_ho
    return out_seq, h_final


def rnn_forward(x, h, w_x, w_h, b_ih, w_ho, b_ho, **kw):
    """Single-step forward matching PyTorch RNN.forward(input, hidden)."""
    out_seq, h_new = rnn_forward_seq(x[None], h, w_x, w_h, b_ih, w_ho, b_ho, **kw)
    return out_seq[0], h_new


def init_params(key, input_size, hidden_size, output_size):
    """nn.Linear-style U(-1/sqrt(fan_in), 1/sqrt(fan_in)); stored pre-transposed
    as [in_features, out_features] (so reference math is x @ W + b)."""
    k1, k2, k3, k4 = jax.random.split(key, 4)
    fan_i2h = input_size + hidden_size
    b1 = 1.0 / jnp.sqrt(jnp.float32(fan_i2h))
    b2 = 1.0 / jnp.sqrt(jnp.float32(hidden_size))
    w_i2h = jax.random.uniform(k1, (fan_i2h, hidden_size), jnp.float32, -b1, b1)
    b_i2h = jax.random.uniform(k2, (hidden_size,), jnp.float32, -b1, b1)
    w_h2o = jax.random.uniform(k3, (hidden_size, output_size), jnp.float32, -b2, b2)
    b_h2o = jax.random.uniform(k4, (output_size,), jnp.float32, -b2, b2)
    return w_i2h, b_i2h, w_h2o, b_h2o


def rnn_reference_f32(x_seq, h0, w_i2h, b_i2h, w_h2o, b_h2o):
    """Pure f32 reference: the PyTorch forward applied per timestep (eval mode)."""
    hp = jax.lax.Precision.HIGHEST
    def step(h, x_t):
        combined = jnp.concatenate([x_t, h], axis=1)
        h_new = jnp.dot(combined, w_i2h, precision=hp) + b_i2h   # i2h; dropout=id
        out = jnp.dot(h_new, w_h2o, precision=hp) + b_h2o        # h2o
        return h_new, out
    h_final, outs = jax.lax.scan(step, h0, x_seq)
    return outs, h_final


def rnn_reference_bf16(x_seq, h0, w_x, w_h_bf16, b_ih, w_ho, b_ho):
    """Reference that mirrors the kernel's numerics (bf16 dot inputs, f32 accum)."""
    xw = jnp.einsum("tbi,ih->tbh", x_seq, w_x,
                    preferred_element_type=jnp.float32) + b_ih
    def step(h, xw_t):
        h_new = xw_t + jnp.dot(h.astype(jnp.bfloat16), w_h_bf16,
                               preferred_element_type=jnp.float32)
        return h_new, h_new.astype(jnp.bfloat16)
    h_final, h_seq = jax.lax.scan(step, h0, xw)
    out = jnp.einsum("tbh,ho->tbo", h_seq.astype(jnp.float32), w_ho,
                     preferred_element_type=jnp.float32) + b_ho
    return out, h_final


if __name__ == "__main__":
    key = jax.random.PRNGKey(0)
    kx, kp = jax.random.split(key)

    x_seq = jax.random.normal(kx, (SEQ_LEN, BATCH, INPUT_SIZE), jnp.float32)
    h0 = jnp.zeros((BATCH, HIDDEN_SIZE), jnp.float32)   # init_hidden

    w_i2h, b_i2h, w_h2o, b_h2o = init_params(kp, INPUT_SIZE, HIDDEN_SIZE,
                                             OUTPUT_SIZE)
    params = prepare_params(w_i2h, b_i2h, w_h2o, b_h2o, INPUT_SIZE)

    # Defaults: block_b = B, block_t = T  ->  grid (1, 1) (best for v5e/v6e).
    # On v7x call with block_b=BATCH // 2 to shard batch across both TensorCores.
    fwd_seq = jax.jit(rnn_forward_seq)
    out_seq, h_final = fwd_seq(x_seq, h0, *params)
    jax.block_until_ready((out_seq, h_final))

    # --- correctness vs. kernel-numerics reference (bf16 recurrent dot) ------
    out_b, h_b = jax.jit(rnn_reference_bf16)(x_seq, h0, *params)
    assert jnp.allclose(out_seq, out_b, rtol=1e-3, atol=1e-3), "kernel != bf16 ref (out)"
    assert jnp.allclose(h_final, h_b, rtol=1e-3, atol=1e-3), "kernel != bf16 ref (h)"

    # --- correctness vs. pure-f32 PyTorch-semantics reference ----------------
    out_f, h_f = jax.jit(rnn_reference_f32)(x_seq, h0, w_i2h, b_i2h, w_h2o, b_h2o)
    assert jnp.allclose(out_seq, out_f, rtol=2e-2, atol=2e-2), "sequence output mismatch"
    assert jnp.allclose(h_final, h_f, rtol=2e-2, atol=2e-2), "final hidden mismatch"

    # --- single-step call (== the PyTorch module forward) --------------------
    fwd_step = jax.jit(rnn_forward)
    out1, h1 = fwd_step(x_seq[0], h0, *params)
    jax.block_until_ready((out1, h1))
    combined = jnp.concatenate([x_seq[0], h0], axis=1)
    h1_ref = jnp.dot(combined, w_i2h, precision=jax.lax.Precision.HIGHEST) + b_i2h
    out1_ref = jnp.dot(h1_ref, w_h2o, precision=jax.lax.Precision.HIGHEST) + b_h2o
    assert jnp.allclose(out1, out1_ref, rtol=1e-2, atol=1e-2), "step output mismatch"
    assert jnp.allclose(h1, h1_ref, rtol=1e-2, atol=1e-2), "step hidden mismatch"

    print("KERNEL_OK")
</pallas_src>

<mosaic_0001>
module attributes {stable_mosaic.version = 11 : i64} {
  func.func @rnn_seq_kernel(%arg0: i32, %arg1: i32, %arg2: memref<8x64x256xf32, #tpu.memory_space<vmem>>, %arg3: memref<64x256xf32, #tpu.memory_space<vmem>>, %arg4: memref<256x256xbf16, #tpu.memory_space<vmem>>, %arg5: memref<8x64x256xbf16, #tpu.memory_space<vmem>>, %arg6: memref<64x256xf32, #tpu.memory_space<vmem>>) attributes {dimension_semantics = [#tpu.dimension_semantics<parallel>, #tpu.dimension_semantics<arbitrary>], iteration_bounds = array<i64: 1, 1>, scalar_prefetch = 0 : i64, scratch_operands = 0 : i64, tpu.core_type = #tpu.core_type<tc>, window_params = [{transform_indices = @transform_0, window_bounds = array<i64: 8, 64, 256>}, {transform_indices = @transform_1, window_bounds = array<i64: 64, 256>}, {pipeline_mode = #tpu.pipeline_mode<synchronous>, transform_indices = @transform_2, window_bounds = array<i64: 256, 256>}, {transform_indices = @transform_3, window_bounds = array<i64: 8, 64, 256>}, {transform_indices = @transform_4, window_bounds = array<i64: 64, 256>}]} {
    %c0_i32 = arith.constant 0 : i32
    %0 = arith.cmpi eq, %arg1, %c0_i32 : i32
    %1 = arith.extui %0 : i1 to i32
    %c0_i32_0 = arith.constant 0 : i32
    %2 = arith.cmpi ne, %1, %c0_i32_0 : i32
    scf.if %2 {
      %c0_46 = arith.constant 0 : index
      %c0_47 = arith.constant 0 : index
      %94 = vector.load %arg3[%c0_46, %c0_47] : memref<64x256xf32, #tpu.memory_space<vmem>>, vector<64x256xf32>
      %c0_48 = arith.constant 0 : index
      %c0_49 = arith.constant 0 : index
      %95 = vector.load %arg6[%c0_48, %c0_49] : memref<64x256xf32, #tpu.memory_space<vmem>>, vector<64x256xf32>
      tpu.vector_store %arg6[%c0_48, %c0_49], %94 {strides = array<i32>} : memref<64x256xf32, #tpu.memory_space<vmem>>, vector<64x256xf32>,
    } else {
    }
    %c0 = arith.constant 0 : index
    %c0_1 = arith.constant 0 : index
    %3 = vector.load %arg4[%c0, %c0_1] : memref<256x256xbf16, #tpu.memory_space<vmem>>, vector<256x256xbf16>
    %c0_2 = arith.constant 0 : index
    %c0_3 = arith.constant 0 : index
    %4 = vector.load %arg6[%c0_2, %c0_3] : memref<64x256xf32, #tpu.memory_space<vmem>>, vector<64x256xf32>
    %c0_i32_4 = arith.constant 0 : i32
    %5 = arith.index_cast %c0_i32_4 : i32 to index
    %c0_5 = arith.constant 0 : index
    %c0_6 = arith.constant 0 : index
    %6 = vector.load %arg2[%5, %c0_5, %c0_6] : memref<8x64x256xf32, #tpu.memory_space<vmem>>, vector<1x64x256xf32>
    %7 = vector.shape_cast %6 : vector<1x64x256xf32> to vector<64x256xf32>
    %8 = arith.truncf %4 : vector<64x256xf32> to vector<64x256xbf16>
    %cst = arith.constant dense<0.000000e+00> : vector<64x256xf32>
    %9 = tpu.matmul %8, %3, %cst {dimension_numbers = #tpu.dot_dimension_numbers<[1], [0], [0], [1], [0, 0, 1, 1], [], []>} : vector<64x256xbf16>, vector<256x256xbf16>, vector<64x256xf32> -> vector<64x256xf32>
    %10 = arith.addf %7, %9 : vector<64x256xf32>
    %11 = arith.truncf %10 : vector<64x256xf32> to vector<64x256xbf16>
    %12 = arith.index_cast %c0_i32_4 : i32 to index
    %c0_7 = arith.constant 0 : index
    %c0_8 = arith.constant 0 : index
    %13 = vector.load %arg5[%12, %c0_7, %c0_8] : memref<8x64x256xbf16, #tpu.memory_space<vmem>>, vector<1x64x256xbf16>
    %14 = vector.shape_cast %13 : vector<1x64x256xbf16> to vector<64x256xbf16>
    %15 = vector.shape_cast %11 : vector<64x256xbf16> to vector<1x64x256xbf16>
    tpu.vector_store %arg5[%12, %c0_7, %c0_8], %15 {strides = array<i32>} : memref<8x64x256xbf16, #tpu.memory_space<vmem>>, vector<1x64x256xbf16>,
    %c1_i32 = arith.constant 1 : i32
    %16 = arith.index_cast %c1_i32 : i32 to index
    %c0_9 = arith.constant 0 : index
    %c0_10 = arith.constant 0 : index
    %17 = vector.load %arg2[%16, %c0_9, %c0_10] : memref<8x64x256xf32, #tpu.memory_space<vmem>>, vector<1x64x256xf32>
    %18 = vector.shape_cast %17 : vector<1x64x256xf32> to vector<64x256xf32>
    %19 = arith.truncf %10 : vector<64x256xf32> to vector<64x256xbf16>
    %cst_11 = arith.constant dense<0.000000e+00> : vector<64x256xf32>
    %20 = tpu.matmul %19, %3, %cst_11 {dimension_numbers = #tpu.dot_dimension_numbers<[1], [0], [0], [1], [0, 0, 1, 1], [], []>} : vector<64x256xbf16>, vector<256x256xbf16>, vector<64x256xf32> -> vector<64x256xf32>
    %21 = arith.addf %18, %20 : vector<64x256xf32>
    %22 = arith.truncf %21 : vector<64x256xf32> to vector<64x256xbf16>
    %23 = arith.index_cast %c1_i32 : i32 to index
    %c0_12 = arith.constant 0 : index
    %c0_13 = arith.constant 0 : index
    %24 = vector.load %arg5[%23, %c0_12, %c0_13] : memref<8x64x256xbf16, #tpu.memory_space<vmem>>, vector<1x64x256xbf16>
    %25 = vector.shape_cast %24 : vector<1x64x256xbf16> to vector<64x256xbf16>
    %26 = vector.shape_cast %22 : vector<64x256xbf16> to vector<1x64x256xbf16>
    tpu.vector_store %arg5[%23, %c0_12, %c0_13], %26 {strides = array<i32>} : memref<8x64x256xbf16, #tpu.memory_space<vmem>>, vector<1x64x256xbf16>,
    %c2_i32 = arith.constant 2 : i32
    %27 = arith.index_cast %c2_i32 : i32 to index
    %c0_14 = arith.constant 0 : index
    %c0_15 = arith.constant 0 : index
    %28 = vector.load %arg2[%27, %c0_14, %c0_15] : memref<8x64x256xf32, #tpu.memory_space<vmem>>, vector<1x64x256xf32>
    %29 = vector.shape_cast %28 : vector<1x64x256xf32> to vector<64x256xf32>
    %30 = arith.truncf %21 : vector<64x256xf32> to vector<64x256xbf16>
    %cst_16 = arith.constant dense<0.000000e+00> : vector<64x256xf32>
    %31 = tpu.matmul %30, %3, %cst_16 {dimension_numbers = #tpu.dot_dimension_numbers<[1], [0], [0], [1], [0, 0, 1, 1], [], []>} : vector<64x256xbf16>, vector<256x256xbf16>, vector<64x256xf32> -> vector<64x256xf32>
    %32 = arith.addf %29, %31 : vector<64x256xf32>
    %33 = arith.truncf %32 : vector<64x256xf32> to vector<64x256xbf16>
    %34 = arith.index_cast %c2_i32 : i32 to index
    %c0_17 = arith.constant 0 : index
    %c0_18 = arith.constant 0 : index
    %35 = vector.load %arg5[%34, %c0_17, %c0_18] : memref<8x64x256xbf16, #tpu.memory_space<vmem>>, vector<1x64x256xbf16>
    %36 = vector.shape_cast %35 : vector<1x64x256xbf16> to vector<64x256xbf16>
    %37 = vector.shape_cast %33 : vector<64x256xbf16> to vector<1x64x256xbf16>
    tpu.vector_store %arg5[%34, %c0_17, %c0_18], %37 {strides = array<i32>} : memref<8x64x256xbf16, #tpu.memory_space<vmem>>, vector<1x64x256xbf16>,
    %c3_i32 = arith.constant 3 : i32
    %38 = arith.index_cast %c3_i32 : i32 to index
    %c0_19 = arith.constant 0 : index
    %c0_20 = arith.constant 0 : index
    %39 = vector.load %arg2[%38, %c0_19, %c0_20] : memref<8x64x256xf32, #tpu.memory_space<vmem>>, vector<1x64x256xf32>
    %40 = vector.shape_cast %39 : vector<1x64x256xf32> to vector<64x256xf32>
    %41 = arith.truncf %32 : vector<64x256xf32> to vector<64x256xbf16>
    %cst_21 = arith.constant dense<0.000000e+00> : vector<64x256xf32>
    %42 = tpu.matmul %41, %3, %cst_21 {dimension_numbers = #tpu.dot_dimension_numbers<[1], [0], [0], [1], [0, 0, 1, 1], [], []>} : vector<64x256xbf16>, vector<256x256xbf16>, vector<64x256xf32> -> vector<64x256xf32>
    %43 = arith.addf %40, %42 : vector<64x256xf32>
    %44 = arith.truncf %43 : vector<64x256xf32> to vector<64x256xbf16>
    %45 = arith.index_cast %c3_i32 : i32 to index
    %c0_22 = arith.constant 0 : index
    %c0_23 = arith.constant 0 : index
    %46 = vector.load %arg5[%45, %c0_22, %c0_23] : memref<8x64x256xbf16, #tpu.memory_space<vmem>>, vector<1x64x256xbf16>
    %47 = vector.shape_cast %46 : vector<1x64x256xbf16> to vector<64x256xbf16>
    %48 = vector.shape_cast %44 : vector<64x256xbf16> to vector<1x64x256xbf16>
    tpu.vector_store %arg5[%45, %c0_22, %c0_23], %48 {strides = array<i32>} : memref<8x64x256xbf16, #tpu.memory_space<vmem>>, vector<1x64x256xbf16>,
    %c4_i32 = arith.constant 4 : i32
    %49 = arith.index_cast %c4_i32 : i32 to index
    %c0_24 = arith.constant 0 : index
    %c0_25 = arith.constant 0 : index
    %50 = vector.load %arg2[%49, %c0_24, %c0_25] : memref<8x64x256xf32, #tpu.memory_space<vmem>>, vector<1x64x256xf32>
    %51 = vector.shape_cast %50 : vector<1x64x256xf32> to vector<64x256xf32>
    %52 = arith.truncf %43 : vector<64x256xf32> to vector<64x256xbf16>
    %cst_26 = arith.constant dense<0.000000e+00> : vector<64x256xf32>
    %53 = tpu.matmul %52, %3, %cst_26 {dimension_numbers = #tpu.dot_dimension_numbers<[1], [0], [0], [1], [0, 0, 1, 1], [], []>} : vector<64x256xbf16>, vector<256x256xbf16>, vector<64x256xf32> -> vector<64x256xf32>
    %54 = arith.addf %51, %53 : vector<64x256xf32>
    %55 = arith.truncf %54 : vector<64x256xf32> to vector<64x256xbf16>
    %56 = arith.index_cast %c4_i32 : i32 to index
    %c0_27 = arith.constant 0 : index
    %c0_28 = arith.constant 0 : index
    %57 = vector.load %arg5[%56, %c0_27, %c0_28] : memref<8x64x256xbf16, #tpu.memory_space<vmem>>, vector<1x64x256xbf16>
    %58 = vector.shape_cast %57 : vector<1x64x256xbf16> to vector<64x256xbf16>
    %59 = vector.shape_cast %55 : vector<64x256xbf16> to vector<1x64x256xbf16>
    tpu.vector_store %arg5[%56, %c0_27, %c0_28], %59 {strides = array<i32>} : memref<8x64x256xbf16, #tpu.memory_space<vmem>>, vector<1x64x256xbf16>,
    %c5_i32 = arith.constant 5 : i32
    %60 = arith.index_cast %c5_i32 : i32 to index
    %c0_29 = arith.constant 0 : index
    %c0_30 = arith.constant 0 : index
    %61 = vector.load %arg2[%60, %c0_29, %c0_30] : memref<8x64x256xf32, #tpu.memory_space<vmem>>, vector<1x64x256xf32>
    %62 = vector.shape_cast %61 : vector<1x64x256xf32> to vector<64x256xf32>
    %63 = arith.truncf %54 : vector<64x256xf32> to vector<64x256xbf16>
    %cst_31 = arith.constant dense<0.000000e+00> : vector<64x256xf32>
    %64 = tpu.matmul %63, %3, %cst_31 {dimension_numbers = #tpu.dot_dimension_numbers<[1], [0], [0], [1], [0, 0, 1, 1], [], []>} : vector<64x256xbf16>, vector<256x256xbf16>, vector<64x256xf32> -> vector<64x256xf32>
    %65 = arith.addf %62, %64 : vector<64x256xf32>
    %66 = arith.truncf %65 : vector<64x256xf32> to vector<64x256xbf16>
    %67 = arith.index_cast %c5_i32 : i32 to index
    %c0_32 = arith.constant 0 : index
    %c0_33 = arith.constant 0 : index
    %68 = vector.load %arg5[%67, %c0_32, %c0_33] : memref<8x64x256xbf16, #tpu.memory_space<vmem>>, vector<1x64x256xbf16>
    %69 = vector.shape_cast %68 : vector<1x64x256xbf16> to vector<64x256xbf16>
    %70 = vector.shape_cast %66 : vector<64x256xbf16> to vector<1x64x256xbf16>
    tpu.vector_store %arg5[%67, %c0_32, %c0_33], %70 {strides = array<i32>} : memref<8x64x256xbf16, #tpu.memory_space<vmem>>, vector<1x64x256xbf16>,
    %c6_i32 = arith.constant 6 : i32
    %71 = arith.index_cast %c6_i32 : i32 to index
    %c0_34 = arith.constant 0 : index
    %c0_35 = arith.constant 0 : index
    %72 = vector.load %arg2[%71, %c0_34, %c0_35] : memref<8x64x256xf32, #tpu.memory_space<vmem>>, vector<1x64x256xf32>
    %73 = vector.shape_cast %72 : vector<1x64x256xf32> to vector<64x256xf32>
    %74 = arith.truncf %65 : vector<64x256xf32> to vector<64x256xbf16>
    %cst_36 = arith.constant dense<0.000000e+00> : vector<64x256xf32>
    %75 = tpu.matmul %74, %3, %cst_36 {dimension_numbers = #tpu.dot_dimension_numbers<[1], [0], [0], [1], [0, 0, 1, 1], [], []>} : vector<64x256xbf16>, vector<256x256xbf16>, vector<64x256xf32> -> vector<64x256xf32>
    %76 = arith.addf %73, %75 : vector<64x256xf32>
    %77 = arith.truncf %76 : vector<64x256xf32> to vector<64x256xbf16>
    %78 = arith.index_cast %c6_i32 : i32 to index
    %c0_37 = arith.constant 0 : index
    %c0_38 = arith.constant 0 : index
    %79 = vector.load %arg5[%78, %c0_37, %c0_38] : memref<8x64x256xbf16, #tpu.memory_space<vmem>>, vector<1x64x256xbf16>
    %80 = vector.shape_cast %79 : vector<1x64x256xbf16> to vector<64x256xbf16>
    %81 = vector.shape_cast %77 : vector<64x256xbf16> to vector<1x64x256xbf16>
    tpu.vector_store %arg5[%78, %c0_37, %c0_38], %81 {strides = array<i32>} : memref<8x64x256xbf16, #tpu.memory_space<vmem>>, vector<1x64x256xbf16>,
    %c7_i32 = arith.constant 7 : i32
    %82 = arith.index_cast %c7_i32 : i32 to index
    %c0_39 = arith.constant 0 : index
    %c0_40 = arith.constant 0 : index
    %83 = vector.load %arg2[%82, %c0_39, %c0_40] : memref<8x64x256xf32, #tpu.memory_space<vmem>>, vector<1x64x256xf32>
    %84 = vector.shape_cast %83 : vector<1x64x256xf32> to vector<64x256xf32>
    %85 = arith.truncf %76 : vector<64x256xf32> to vector<64x256xbf16>
    %cst_41 = arith.constant dense<0.000000e+00> : vector<64x256xf32>
    %86 = tpu.matmul %85, %3, %cst_41 {dimension_numbers = #tpu.dot_dimension_numbers<[1], [0], [0], [1], [0, 0, 1, 1], [], []>} : vector<64x256xbf16>, vector<256x256xbf16>, vector<64x256xf32> -> vector<64x256xf32>
    %87 = arith.addf %84, %86 : vector<64x256xf32>
    %88 = arith.truncf %87 : vector<64x256xf32> to vector<64x256xbf16>
    %89 = arith.index_cast %c7_i32 : i32 to index
    %c0_42 = arith.constant 0 : index
    %c0_43 = arith.constant 0 : index
    %90 = vector.load %arg5[%89, %c0_42, %c0_43] : memref<8x64x256xbf16, #tpu.memory_space<vmem>>, vector<1x64x256xbf16>
    %91 = vector.shape_cast %90 : vector<1x64x256xbf16> to vector<64x256xbf16>
    %92 = vector.shape_cast %88 : vector<64x256xbf16> to vector<1x64x256xbf16>
    tpu.vector_store %arg5[%89, %c0_42, %c0_43], %92 {strides = array<i32>} : memref<8x64x256xbf16, #tpu.memory_space<vmem>>, vector<1x64x256xbf16>,
    %c8_i32 = arith.constant 8 : i32
    %c0_44 = arith.constant 0 : index
    %c0_45 = arith.constant 0 : index
    %93 = vector.load %arg6[%c0_44, %c0_45] : memref<64x256xf32, #tpu.memory_space<vmem>>, vector<64x256xf32>
    tpu.vector_store %arg6[%c0_44, %c0_45], %87 {strides = array<i32>} : memref<64x256xf32, #tpu.memory_space<vmem>>, vector<64x256xf32>,
    return
  }
  func.func @transform_0(%arg0: i32, %arg1: i32) -> (i32, i32, i32) {
    %c0_i32 = arith.constant 0 : i32
    %c0_i32_0 = arith.constant 0 : i32
    return %arg1, %arg0, %c0_i32 : i32, i32, i32
  }
  func.func @transform_1(%arg0: i32, %arg1: i32) -> (i32, i32) {
    %c0_i32 = arith.constant 0 : i32
    %c0_i32_0 = arith.constant 0 : i32
    return %arg0, %c0_i32 : i32, i32
  }
  func.func @transform_2(%arg0: i32, %arg1: i32) -> (i32, i32) {
    %c0_i32 = arith.constant 0 : i32
    %c0_i32_0 = arith.constant 0 : i32
    %c0_i32_1 = arith.constant 0 : i32
    return %c0_i32, %c0_i32_0 : i32, i32
  }
  func.func @transform_3(%arg0: i32, %arg1: i32) -> (i32, i32, i32) {
    %c0_i32 = arith.constant 0 : i32
    %c0_i32_0 = arith.constant 0 : i32
    return %arg1, %arg0, %c0_i32 : i32, i32, i32
  }
  func.func @transform_4(%arg0: i32, %arg1: i32) -> (i32, i32) {
    %c0_i32 = arith.constant 0 : i32
    %c0_i32_0 = arith.constant 0 : i32
    return %arg0, %c0_i32 : i32, i32
  }
}

</mosaic_0001>

<llo_original>
// kernel: rnn_forward_seq.1
$region0: #{rnn_forward_seq.1}
  #allocation0 [shape = 'u32[]', space=smem, size = 0x4, offset = 0x4, fixed_abs, tag = 'smem constant byte address 0x4 - core index']
  #allocation1 [shape = 'u32[144,128]{1,0:T(1,128)}', space=vmem, size = 0x12000, scoped, tag = 'internal scratch']
  %s0 = inlined_call_operand.vmem [shape: f32[8,64,256], index: 0, kind: input, shape index: {}]
  %s1 = inlined_call_operand.vmem [shape: f32[64,256], index: 1, kind: input, shape index: {}, may-alias: {1,4}]
  %s2 = inlined_call_operand.vmem [shape: bf16[256,256], index: 2, kind: input, shape index: {}]
  %s3 = inlined_call_operand.vmem [shape: bf16[8,64,256], index: 3, kind: output, shape index: {0}]
  %s4 = inlined_call_operand.vmem [shape: f32[64,256], index: 4, kind: output, shape index: {1}, may-alias: {1,4}]
  %5 = xla_tuple %s3, %s4
  %s6 = sld [smem:[#allocation0]]
  $region34: #{rnn_forward_seq.1} parent=0
    _
  %s8 = ssub.s32 1, %s6
  %s9 = scalar_select 0, %s8, %s6
  // Predicated region
  $region2: #{rnn_forward_seq.1} parent=0 // pred_check
    _
  $region3: #{rnn_forward_seq.1} parent=0 // pred_check_branch
    %11 = sbr.rel (0) target = $region5
  $region4: #{rnn_forward_seq.1} parent=0 // pred_region
    _
  $region5: #{rnn_forward_seq.1} parent=0 // pred_fallthru
    _
  // Predicated region
  $region6: #{rnn_forward_seq.1} parent=0 // pred_check
    _
  $region7: #{rnn_forward_seq.1} parent=0 // pred_check_branch
    %13 = sbr.rel (0) target = $region9
  $region8: #{rnn_forward_seq.1} parent=0 // pred_region
    _
  $region9: #{rnn_forward_seq.1} parent=0 // pred_fallthru
    _
  // Predicated region
  $region10: #{rnn_forward_seq.1} parent=0 // pred_check
    _
  $region11: #{rnn_forward_seq.1} parent=0 // pred_check_branch
    %15 = sbr.rel (0) target = $region13
  $region12: #{rnn_forward_seq.1} parent=0 // pred_region
    _
  $region13: #{rnn_forward_seq.1} parent=0 // pred_fallthru
    _
  %p16 = scmp.eq.s32.totalorder 0, 0
  // Predicated region
  $region14: #{rnn_forward_seq.1} parent=0 // pred_check
    %p17 = pneg %p16
  $region15: #{rnn_forward_seq.1} parent=0 // pred_check_branch
    %19 = sbr.rel (%p17) target = $region17
  $region16: #{rnn_forward_seq.1} parent=0 // pred_region
    %v20 = vld [vmem:[%s1] sm:$0xff]
    %v21 = vld [vmem:[%s1 + $0x8] sm:$0xff]
    %v22 = vld [vmem:[%s1 + $0x10] sm:$0xff]
    %v23 = vld [vmem:[%s1 + $0x18] sm:$0xff]
    %v24 = vld [vmem:[%s1 + $0x20] sm:$0xff]
    %v25 = vld [vmem:[%s1 + $0x28] sm:$0xff]
    %v26 = vld [vmem:[%s1 + $0x30] sm:$0xff]
    %v27 = vld [vmem:[%s1 + $0x38] sm:$0xff]
    %v28 = vld [vmem:[%s1 + $0x40] sm:$0xff]
    %v29 = vld [vmem:[%s1 + $0x48] sm:$0xff]
    %v30 = vld [vmem:[%s1 + $0x50] sm:$0xff]
    %v31 = vld [vmem:[%s1 + $0x58] sm:$0xff]
    %v32 = vld [vmem:[%s1 + $0x60] sm:$0xff]
    %v33 = vld [vmem:[%s1 + $0x68] sm:$0xff]
    %v34 = vld [vmem:[%s1 + $0x70] sm:$0xff]
    %v35 = vld [vmem:[%s1 + $0x78] sm:$0xff]
    %36 = vst [vmem:[%s4] sm:$0xff] %v20
    %37 = vst [vmem:[%s4 + $0x8] sm:$0xff] %v21
    %38 = vst [vmem:[%s4 + $0x10] sm:$0xff] %v22
    %39 = vst [vmem:[%s4 + $0x18] sm:$0xff] %v23
    %40 = vst [vmem:[%s4 + $0x20] sm:$0xff] %v24
    %41 = vst [vmem:[%s4 + $0x28] sm:$0xff] %v25
    %42 = vst [vmem:[%s4 + $0x30] sm:$0xff] %v26
    %43 = vst [vmem:[%s4 + $0x38] sm:$0xff] %v27
    %44 = vst [vmem:[%s4 + $0x40] sm:$0xff] %v28
    %45 = vst [vmem:[%s4 + $0x48] sm:$0xff] %v29
    %46 = vst [vmem:[%s4 + $0x50] sm:$0xff] %v30
    %47 = vst [vmem:[%s4 + $0x58] sm:$0xff] %v31
    %48 = vst [vmem:[%s4 + $0x60] sm:$0xff] %v32
    %49 = vst [vmem:[%s4 + $0x68] sm:$0xff] %v33
    %50 = vst [vmem:[%s4 + $0x70] sm:$0xff] %v34
    %51 = vst [vmem:[%s4 + $0x78] sm:$0xff] %v35
  $region17: #{rnn_forward_seq.1} parent=0 // pred_fallthru
    _
  %v52 = vld [vmem:[%s2] sm:$0xff]
  %v53 = vld [vmem:[%s2 + $0x8] sm:$0xff]
  %v54 = vld [vmem:[%s2 + $0x10] sm:$0xff]
  %v55 = vld [vmem:[%s2 + $0x18] sm:$0xff]
  %v56 = vld [vmem:[%s2 + $0x20] sm:$0xff]
  %v57 = vld [vmem:[%s2 + $0x28] sm:$0xff]
  %v58 = vld [vmem:[%s2 + $0x30] sm:$0xff]
  %v59 = vld [vmem:[%s2 + $0x38] sm:$0xff]
  %v60 = vld [vmem:[%s2 + $0x40] sm:$0xff]
  %v61 = vld [vmem:[%s2 + $0x48] sm:$0xff]
  %v62 = vld [vmem:[%s2 + $0x50] sm:$0xff]
  %v63 = vld [vmem:[%s2 + $0x58] sm:$0xff]
  %v64 = vld [vmem:[%s2 + $0x60] sm:$0xff]
  %v65 = vld [vmem:[%s2 + $0x68] sm:$0xff]
  %v66 = vld [vmem:[%s2 + $0x70] sm:$0xff]
  %v67 = vld [vmem:[%s2 + $0x78] sm:$0xff]
  %v68 = vld [vmem:[%s2 + $0x80] sm:$0xff]
  %v69 = vld [vmem:[%s2 + $0x88] sm:$0xff]
  %v70 = vld [vmem:[%s2 + $0x90] sm:$0xff]
  %v71 = vld [vmem:[%s2 + $0x98] sm:$0xff]
  %v72 = vld [vmem:[%s2 + $0xa0] sm:$0xff]
  %v73 = vld [vmem:[%s2 + $0xa8] sm:$0xff]
  %v74 = vld [vmem:[%s2 + $0xb0] sm:$0xff]
  %v75 = vld [vmem:[%s2 + $0xb8] sm:$0xff]
  %v76 = vld [vmem:[%s2 + $0xc0] sm:$0xff]
  %v77 = vld [vmem:[%s2 + $0xc8] sm:$0xff]
  %v78 = vld [vmem:[%s2 + $0xd0] sm:$0xff]
  %v79 = vld [vmem:[%s2 + $0xd8] sm:$0xff]
  %v80 = vld [vmem:[%s2 + $0xe0] sm:$0xff]
  %v81 = vld [vmem:[%s2 + $0xe8] sm:$0xff]
  %v82 = vld [vmem:[%s2 + $0xf0] sm:$0xff]
  %v83 = vld [vmem:[%s2 + $0xf8] sm:$0xff]
  %v84 = vld [vmem:[%s4] sm:$0xff]
  %v85 = vld [vmem:[%s4 + $0x8] sm:$0xff]
  %v86 = vld [vmem:[%s4 + $0x10] sm:$0xff]
  %v87 = vld [vmem:[%s4 + $0x18] sm:$0xff]
  %v88 = vld [vmem:[%s4 + $0x20] sm:$0xff]
  %v89 = vld [vmem:[%s4 + $0x28] sm:$0xff]
  %v90 = vld [vmem:[%s4 + $0x30] sm:$0xff]
  %v91 = vld [vmem:[%s4 + $0x38] sm:$0xff]
  %v92 = vld [vmem:[%s4 + $0x40] sm:$0xff]
  %v93 = vld [vmem:[%s4 + $0x48] sm:$0xff]
  %v94 = vld [vmem:[%s4 + $0x50] sm:$0xff]
  %v95 = vld [vmem:[%s4 + $0x58] sm:$0xff]
  %v96 = vld [vmem:[%s4 + $0x60] sm:$0xff]
  %v97 = vld [vmem:[%s4 + $0x68] sm:$0xff]
  %v98 = vld [vmem:[%s4 + $0x70] sm:$0xff]
  %v99 = vld [vmem:[%s4 + $0x78] sm:$0xff]
  %v100 = vld [vmem:[%s0] sm:$0xff]
  %v101 = vld [vmem:[%s0 + $0x8] sm:$0xff]
  %v102 = vld [vmem:[%s0 + $0x10] sm:$0xff]
  %v103 = vld [vmem:[%s0 + $0x18] sm:$0xff]
  %v104 = vld [vmem:[%s0 + $0x20] sm:$0xff]
  %v105 = vld [vmem:[%s0 + $0x28] sm:$0xff]
  %v106 = vld [vmem:[%s0 + $0x30] sm:$0xff]
  %v107 = vld [vmem:[%s0 + $0x38] sm:$0xff]
  %v108 = vld [vmem:[%s0 + $0x40] sm:$0xff]
  %v109 = vld [vmem:[%s0 + $0x48] sm:$0xff]
  %v110 = vld [vmem:[%s0 + $0x50] sm:$0xff]
  %v111 = vld [vmem:[%s0 + $0x58] sm:$0xff]
  %v112 = vld [vmem:[%s0 + $0x60] sm:$0xff]
  %v113 = vld [vmem:[%s0 + $0x68] sm:$0xff]
  %v114 = vld [vmem:[%s0 + $0x70] sm:$0xff]
  %v115 = vld [vmem:[%s0 + $0x78] sm:$0xff]
  %v116 = vpack.c.bf16 %v86, %v84
  %v117 = vpack.c.bf16 %v87, %v85
  %v118 = vpack.c.bf16 %v90, %v88
  %v119 = vpack.c.bf16 %v91, %v89
  %v120 = vpack.c.bf16 %v94, %v92
  %v121 = vpack.c.bf16 %v95, %v93
  %v122 = vpack.c.bf16 %v98, %v96
  %v123 = vpack.c.bf16 %v99, %v97
  %v156 = vunpack.c.l.b16 %v52
  %v157 = vunpack.c.h.b16 %v52
  %v158 = vunpack.c.l.b16 %v53
  %v159 = vunpack.c.h.b16 %v53
  %v160 = vunpack.c.l.b16 %v54
  %v161 = vunpack.c.h.b16 %v54
  %v162 = vunpack.c.l.b16 %v55
  %v163 = vunpack.c.h.b16 %v55
  %v164 = vunpack.c.l.b16 %v56
  %v165 = vunpack.c.h.b16 %v56
  %v166 = vunpack.c.l.b16 %v57
  %v167 = vunpack.c.h.b16 %v57
  %v168 = vunpack.c.l.b16 %v58
  %v169 = vunpack.c.h.b16 %v58
  %v170 = vunpack.c.l.b16 %v59
  %v171 = vunpack.c.h.b16 %v59
  %v172 = vunpack.c.l.b16 %v60
  %v173 = vunpack.c.h.b16 %v60
  %v174 = vunpack.c.l.b16 %v61
  %v175 = vunpack.c.h.b16 %v61
  %v176 = vunpack.c.l.b16 %v62
  %v177 = vunpack.c.h.b16 %v62
  %v178 = vunpack.c.l.b16 %v63
  %v179 = vunpack.c.h.b16 %v63
  %v180 = vunpack.c.l.b16 %v64
  %v181 = vunpack.c.h.b16 %v64
  %v182 = vunpack.c.l.b16 %v65
  %v183 = vunpack.c.h.b16 %v65
  %v184 = vunpack.c.l.b16 %v66
  %v185 = vunpack.c.h.b16 %v66
  %v186 = vunpack.c.l.b16 %v67
  %v187 = vunpack.c.h.b16 %v67
  %v188 = vunpack.c.l.b16 %v68
  %v189 = vunpack.c.h.b16 %v68
  %v190 = vunpack.c.l.b16 %v69
  %v191 = vunpack.c.h.b16 %v69
  %v192 = vunpack.c.l.b16 %v70
  %v193 = vunpack.c.h.b16 %v70
  %v194 = vunpack.c.l.b16 %v71
  %v195 = vunpack.c.h.b16 %v71
  %v196 = vunpack.c.l.b16 %v72
  %v197 = vunpack.c.h.b16 %v72
  %v198 = vunpack.c.l.b16 %v73
  %v199 = vunpack.c.h.b16 %v73
  %v200 = vunpack.c.l.b16 %v74
  %v201 = vunpack.c.h.b16 %v74
  %v202 = vunpack.c.l.b16 %v75
  %v203 = vunpack.c.h.b16 %v75
  %v204 = vunpack.c.l.b16 %v76
  %v205 = vunpack.c.h.b16 %v76
  %v206 = vunpack.c.l.b16 %v77
  %v207 = vunpack.c.h.b16 %v77
  %v208 = vunpack.c.l.b16 %v78
  %v209 = vunpack.c.h.b16 %v78
  %v210 = vunpack.c.l.b16 %v79
  %v211 = vunpack.c.h.b16 %v79
  %v212 = vunpack.c.l.b16 %v80
  %v213 = vunpack.c.h.b16 %v80
  %v214 = vunpack.c.l.b16 %v81
  %v215 = vunpack.c.h.b16 %v81
  %v216 = vunpack.c.l.b16 %v82
  %v217 = vunpack.c.h.b16 %v82
  %v218 = vunpack.c.l.b16 %v83
  %v219 = vunpack.c.h.b16 %v83
  %v220 = vpack.c.b16 %v158, %v156
  %v221 = vpack.c.b16 %v159, %v157
  %v222 = vpack.c.b16 %v162, %v160
  %v223 = vpack.c.b16 %v163, %v161
  %v224 = vpack.c.b16 %v166, %v164
  %v225 = vpack.c.b16 %v167, %v165
  %v226 = vpack.c.b16 %v170, %v168
  %v227 = vpack.c.b16 %v171, %v169
  %v228 = vpack.c.b16 %v174, %v172
  %v229 = vpack.c.b16 %v175, %v173
  %v230 = vpack.c.b16 %v178, %v176
  %v231 = vpack.c.b16 %v179, %v177
  %v232 = vpack.c.b16 %v182, %v180
  %v233 = vpack.c.b16 %v183, %v181
  %v234 = vpack.c.b16 %v186, %v184
  %v235 = vpack.c.b16 %v187, %v185
  %v236 = vpack.c.b16 %v190, %v188
  %v237 = vpack.c.b16 %v191, %v189
  %v238 = vpack.c.b16 %v194, %v192
  %v239 = vpack.c.b16 %v195, %v193
  %v240 = vpack.c.b16 %v198, %v196
  %v241 = vpack.c.b16 %v199, %v197
  %v242 = vpack.c.b16 %v202, %v200
  %v243 = vpack.c.b16 %v203, %v201
  %v244 = vpack.c.b16 %v206, %v204
  %v245 = vpack.c.b16 %v207, %v205
  %v246 = vpack.c.b16 %v210, %v208
  %v247 = vpack.c.b16 %v211, %v209
  %v248 = vpack.c.b16 %v214, %v212
  %v249 = vpack.c.b16 %v215, %v213
  %v250 = vpack.c.b16 %v218, %v216
  %v251 = vpack.c.b16 %v219, %v217
  %284 = vmatprep.subr.bf16.mxu0 %v221
  %285 = vmatpush1.bf16.msra.mxu0 %v220
  %286 = vmatprep.subr.bf16.mxu0 %v223
  %287 = vmatpush1.bf16.msra.mxu0 %v222
  %288 = vmatprep.subr.bf16.mxu0 %v225
  %289 = vmatpush1.bf16.msra.mxu0 %v224
  %290 = vmatprep.subr.bf16.mxu0 %v227
  %291 = vmatpush1.bf16.msra.mxu0 %v226
  %292 = vmatprep.subr.bf16.mxu0 %v229
  %293 = vmatpush1.bf16.msra.mxu0 %v228
  %294 = vmatprep.subr.bf16.mxu0 %v231
  %295 = vmatpush1.bf16.msra.mxu0 %v230
  %296 = vmatprep.subr.bf16.mxu0 %v233
  %297 = vmatpush1.bf16.msra.mxu0 %v232
  %298 = vmatprep.subr.bf16.mxu0 %v235
  %299 = vmatpush1.bf16.msra.mxu0 %v234
  %300 = vmatprep.subr.bf16.mxu0 %v237
  %301 = vmatpush1.bf16.msra.mxu0 %v236
  %302 = vmatprep.subr.bf16.mxu0 %v239
  %303 = vmatpush1.bf16.msra.mxu0 %v238
  %304 = vmatprep.subr.bf16.mxu0 %v241
  %305 = vmatpush1.bf16.msra.mxu0 %v240
  %306 = vmatprep.subr.bf16.mxu0 %v243
  %307 = vmatpush1.bf16.msra.mxu0 %v242
  %308 = vmatprep.subr.bf16.mxu0 %v245
  %309 = vmatpush1.bf16.msra.mxu0 %v244
  %310 = vmatprep.subr.bf16.mxu0 %v247
  %311 = vmatpush1.bf16.msra.mxu0 %v246
  %312 = vmatprep.subr.bf16.mxu0 %v249
  %313 = vmatpush1.bf16.msra.mxu0 %v248
  %314 = vmatprep.subr.bf16.mxu0 %v251
  %315 = vmatpush1.bf16.msra.mxu0 %v250
  %316 = vmatprep.mubr.bf16.mxu0 %v117
  %317 = vmatmul.mubr.bf16.gmra.mrb[0].mxu0 %v116
  %v318 = vpop.f32.mrb[0].mxu0
  %v319 = vadd.f32 0.0, %v318
  %v320 = vpop.f32.mrb[0].mxu0
  %v321 = vadd.f32 0.0, %v320
  %v322 = vpop.f32.mrb[0].mxu0
  %v323 = vadd.f32 0.0, %v322
  %v324 = vpop.f32.mrb[0].mxu0
  %v325 = vadd.f32 0.0, %v324
  %326 = vmatprep.mubr.bf16.mxu0 %v119
  %327 = vmatmul.mubr.bf16.gmra.mrb[0].mxu0 %v118
  %v328 = vpop.f32.mrb[0].mxu0
  %v329 = vadd.f32 0.0, %v328
  %v330 = vpop.f32.mrb[0].mxu0
  %v331 = vadd.f32 0.0, %v330
  %v332 = vpop.f32.mrb[0].mxu0
  %v333 = vadd.f32 0.0, %v332
  %v334 = vpop.f32.mrb[0].mxu0
  %v335 = vadd.f32 0.0, %v334
  %336 = vmatprep.mubr.bf16.mxu0 %v121
  %337 = vmatmul.mubr.bf16.gmra.mrb[0].mxu0 %v120
  %v338 = vpop.f32.mrb[0].mxu0
  %v339 = vadd.f32 0.0, %v338
  %v340 = vpop.f32.mrb[0].mxu0
  %v341 = vadd.f32 0.0, %v340
  %v342 = vpop.f32.mrb[0].mxu0
  %v343 = vadd.f32 0.0, %v342
  %v344 = vpop.f32.mrb[0].mxu0
  %v345 = vadd.f32 0.0, %v344
  %346 = vmatprep.mubr.bf16.mxu0 %v123
  %347 = vmatmul.mubr.bf16.gmra.mrb[0].mxu0 %v122
  %v348 = vpop.f32.mrb[0].mxu0
  %v349 = vadd.f32 0.0, %v348
  %v350 = vpop.f32.mrb[0].mxu0
  %v351 = vadd.f32 0.0, %v350
  %v352 = vpop.f32.mrb[0].mxu0
  %v353 = vadd.f32 0.0, %v352
  %v354 = vpop.f32.mrb[0].mxu0
  %v355 = vadd.f32 0.0, %v354
  %356 = vdwg.mxu0
  %v357 = vadd.f32 %v100, %v319
  %v358 = vadd.f32 %v101, %v321
  %v359 = vadd.f32 %v102, %v323
  %v360 = vadd.f32 %v103, %v325
  %v361 = vadd.f32 %v104, %v329
  %v362 = vadd.f32 %v105, %v331
  %v363 = vadd.f32 %v106, %v333
  %v364 = vadd.f32 %v107, %v335
  %v365 = vadd.f32 %v108, %v339
  %v366 = vadd.f32 %v109, %v341
  %v367 = vadd.f32 %v110, %v343
  %v368 = vadd.f32 %v111, %v345
  %v369 = vadd.f32 %v112, %v349
  %v370 = vadd.f32 %v113, %v351
  %v371 = vadd.f32 %v114, %v353
  %v372 = vadd.f32 %v115, %v355
  %v373 = vpack.c.bf16 %v359, %v357
  %v374 = vpack.c.bf16 %v360, %v358
  %v375 = vpack.c.bf16 %v363, %v361
  %v376 = vpack.c.bf16 %v364, %v362
  %v377 = vpack.c.bf16 %v367, %v365
  %v378 = vpack.c.bf16 %v368, %v366
  %v379 = vpack.c.bf16 %v371, %v369
  %v380 = vpack.c.bf16 %v372, %v370
  %381 = vst [vmem:[%s3] sm:$0xff] %v373
  %382 = vst [vmem:[%s3 + $0x8] sm:$0xff] %v374
  %383 = vst [vmem:[%s3 + $0x10] sm:$0xff] %v375
  %384 = vst [vmem:[%s3 + $0x18] sm:$0xff] %v376
  %385 = vst [vmem:[%s3 + $0x20] sm:$0xff] %v377
  %386 = vst [vmem:[%s3 + $0x28] sm:$0xff] %v378
  %387 = vst [vmem:[%s3 + $0x30] sm:$0xff] %v379
  %388 = vst [vmem:[%s3 + $0x38] sm:$0xff] %v380
  %s389 = scalar_lea.vmem %s0, 128
  %v390 = vld [vmem:[%s389] sm:$0xff]
  %v391 = vld [vmem:[%s389 + $0x8] sm:$0xff]
  %v392 = vld [vmem:[%s389 + $0x10] sm:$0xff]
  %v393 = vld [vmem:[%s389 + $0x18] sm:$0xff]
  %v394 = vld [vmem:[%s389 + $0x20] sm:$0xff]
  %v395 = vld [vmem:[%s389 + $0x28] sm:$0xff]
  %v396 = vld [vmem:[%s389 + $0x30] sm:$0xff]
  %v397 = vld [vmem:[%s389 + $0x38] sm:$0xff]
  %v398 = vld [vmem:[%s389 + $0x40] sm:$0xff]
  %v399 = vld [vmem:[%s389 + $0x48] sm:$0xff]
  %v400 = vld [vmem:[%s389 + $0x50] sm:$0xff]
  %v401 = vld [vmem:[%s389 + $0x58] sm:$0xff]
  %v402 = vld [vmem:[%s389 + $0x60] sm:$0xff]
  %v403 = vld [vmem:[%s389 + $0x68] sm:$0xff]
  %v404 = vld [vmem:[%s389 + $0x70] sm:$0xff]
  %v405 = vld [vmem:[%s389 + $0x78] sm:$0xff]
  %406 = vmatprep.subr.bf16.mxu0 %v221
  %407 = vmatpush1.bf16.msra.mxu0 %v220
  %408 = vmatprep.subr.bf16.mxu0 %v223
  %409 = vmatpush1.bf16.msra.mxu0 %v222
  %410 = vmatprep.subr.bf16.mxu0 %v225
  %411 = vmatpush1.bf16.msra.mxu0 %v224
  %412 = vmatprep.subr.bf16.mxu0 %v227
  %413 = vmatpush1.bf16.msra.mxu0 %v226
  %414 = vmatprep.subr.bf16.mxu0 %v229
  %415 = vmatpush1.bf16.msra.mxu0 %v228
  %416 = vmatprep.subr.bf16.mxu0 %v231
  %417 = vmatpush1.bf16.msra.mxu0 %v230
  %418 = vmatprep.subr.bf16.mxu0 %v233
  %419 = vmatpush1.bf16.msra.mxu0 %v232
  %420 = vmatprep.subr.bf16.mxu0 %v235
  %421 = vmatpush1.bf16.msra.mxu0 %v234
  %422 = vmatprep.subr.bf16.mxu0 %v237
  %423 = vmatpush1.bf16.msra.mxu0 %v236
  %424 = vmatprep.subr.bf16.mxu0 %v239
  %425 = vmatpush1.bf16.msra.mxu0 %v238
  %426 = vmatprep.subr.bf16.mxu0 %v241
  %427 = vmatpush1.bf16.msra.mxu0 %v240
  %428 = vmatprep.subr.bf16.mxu0 %v243
  %429 = vmatpush1.bf16.msra.mxu0 %v242
  %430 = vmatprep.subr.bf16.mxu0 %v245
  %431 = vmatpush1.bf16.msra.mxu0 %v244
  %432 = vmatprep.subr.bf16.mxu0 %v247
  %433 = vmatpush1.bf16.msra.mxu0 %v246
  %434 = vmatprep.subr.bf16.mxu0 %v249
  %435 = vmatpush1.bf16.msra.mxu0 %v248
  %436 = vmatprep.subr.bf16.mxu0 %v251
  %437 = vmatpush1.bf16.msra.mxu0 %v250
  %438 = vmatprep.mubr.bf16.mxu0 %v374
  %439 = vmatmul.mubr.bf16.gmra.mrb[0].mxu0 %v373
  %v440 = vpop.f32.mrb[0].mxu0
  %v441 = vadd.f32 0.0, %v440
  %v442 = vpop.f32.mrb[0].mxu0
  %v443 = vadd.f32 0.0, %v442
  %v444 = vpop.f32.mrb[0].mxu0
  %v445 = vadd.f32 0.0, %v444
  %v446 = vpop.f32.mrb[0].mxu0
  %v447 = vadd.f32 0.0, %v446
  %448 = vmatprep.mubr.bf16.mxu0 %v376
  %449 = vmatmul.mubr.bf16.gmra.mrb[0].mxu0 %v375
  %v450 = vpop.f32.mrb[0].mxu0
  %v451 = vadd.f32 0.0, %v450
  %v452 = vpop.f32.mrb[0].mxu0
  %v453 = vadd.f32 0.0, %v452
  %v454 = vpop.f32.mrb[0].mxu0
  %v455 = vadd.f32 0.0, %v454
  %v456 = vpop.f32.mrb[0].mxu0
  %v457 = vadd.f32 0.0, %v456
  %458 = vmatprep.mubr.bf16.mxu0 %v378
  %459 = vmatmul.mubr.bf16.gmra.mrb[0].mxu0 %v377
  %v460 = vpop.f32.mrb[0].mxu0
  %v461 = vadd.f32 0.0, %v460
  %v462 = vpop.f32.mrb[0].mxu0
  %v463 = vadd.f32 0.0, %v462
  %v464 = vpop.f32.mrb[0].mxu0
  %v465 = vadd.f32 0.0, %v464
  %v466 = vpop.f32.mrb[0].mxu0
  %v467 = vadd.f32 0.0, %v466
  %468 = vmatprep.mubr.bf16.mxu0 %v380
  %469 = vmatmul.mubr.bf16.gmra.mrb[0].mxu0 %v379
  %v470 = vpop.f32.mrb[0].mxu0
  %v471 = vadd.f32 0.0, %v470
  %v472 = vpop.f32.mrb[0].mxu0
  %v473 = vadd.f32 0.0, %v472
  %v474 = vpop.f32.mrb[0].mxu0
  %v475 = vadd.f32 0.0, %v474
  %v476 = vpop.f32.mrb[0].mxu0
  %v477 = vadd.f32 0.0, %v476
  %478 = vdwg.mxu0
  %v479 = vadd.f32 %v390, %v441
  %v480 = vadd.f32 %v391, %v443
  %v481 = vadd.f32 %v392, %v445
  %v482 = vadd.f32 %v393, %v447
  %v483 = vadd.f32 %v394, %v451
  %v484 = vadd.f32 %v395, %v453
  %v485 = vadd.f32 %v396, %v455
  %v486 = vadd.f32 %v397, %v457
  %v487 = vadd.f32 %v398, %v461
  %v488 = vadd.f32 %v399, %v463
  %v489 = vadd.f32 %v400, %v465
  %v490 = vadd.f32 %v401, %v467
  %v491 = vadd.f32 %v402, %v471
  %v492 = vadd.f32 %v403, %v473
  %v493 = vadd.f32 %v404, %v475
  %v494 = vadd.f32 %v405, %v477
  %v495 = vpack.c.bf16 %v481, %v479
  %v496 = vpack.c.bf16 %v482, %v480
  %v497 = vpack.c.bf16 %v485, %v483
  %v498 = vpack.c.bf16 %v486, %v484
  %v499 = vpack.c.bf16 %v489, %v487
  %v500 = vpack.c.bf16 %v490, %v488
  %v501 = vpack.c.bf16 %v493, %v491
  %v502 = vpack.c.bf16 %v494, %v492
  %s503 = scalar_lea.vmem %s3, 64
  %504 = vst [vmem:[%s503] sm:$0xff] %v495
  %505 = vst [vmem:[%s503 + $0x8] sm:$0xff] %v496
  %506 = vst [vmem:[%s503 + $0x10] sm:$0xff] %v497
  %507 = vst [vmem:[%s503 + $0x18] sm:$0xff] %v498
  %508 = vst [vmem:[%s503 + $0x20] sm:$0xff] %v499
  %509 = vst [vmem:[%s503 + $0x28] sm:$0xff] %v500
  %510 = vst [vmem:[%s503 + $0x30] sm:$0xff] %v501
  %511 = vst [vmem:[%s503 + $0x38] sm:$0xff] %v502
  %s512 = scalar_lea.vmem %s0, 256
  %v513 = vld [vmem:[%s512] sm:$0xff]
  %v514 = vld [vmem:[%s512 + $0x8] sm:$0xff]
  %v515 = vld [vmem:[%s512 + $0x10] sm:$0xff]
  %v516 = vld [vmem:[%s512 + $0x18] sm:$0xff]
  %v517 = vld [vmem:[%s512 + $0x20] sm:$0xff]
  %v518 = vld [vmem:[%s512 + $0x28] sm:$0xff]
  %v519 = vld [vmem:[%s512 + $0x30] sm:$0xff]
  %v520 = vld [vmem:[%s512 + $0x38] sm:$0xff]
  %v521 = vld [vmem:[%s512 + $0x40] sm:$0xff]
  %v522 = vld [vmem:[%s512 + $0x48] sm:$0xff]
  %v523 = vld [vmem:[%s512 + $0x50] sm:$0xff]
  %v524 = vld [vmem:[%s512 + $0x58] sm:$0xff]
  %v525 = vld [vmem:[%s512 + $0x60] sm:$0xff]
  %v526 = vld [vmem:[%s512 + $0x68] sm:$0xff]
  %v527 = vld [vmem:[%s512 + $0x70] sm:$0xff]
  %v528 = vld [vmem:[%s512 + $0x78] sm:$0xff]
  %529 = vmatprep.subr.bf16.mxu0 %v221
  %530 = vmatpush1.bf16.msra.mxu0 %v220
  %531 = vmatprep.subr.bf16.mxu0 %v223
  %532 = vmatpush1.bf16.msra.mxu0 %v222
  %533 = vmatprep.subr.bf16.mxu0 %v225
  %534 = vmatpush1.bf16.msra.mxu0 %v224
  %535 = vmatprep.subr.bf16.mxu0 %v227
  %536 = vmatpush1.bf16.msra.mxu0 %v226
  %537 = vmatprep.subr.bf16.mxu0 %v229
  %538 = vmatpush1.bf16.msra.mxu0 %v228
  %539 = vmatprep.subr.bf16.mxu0 %v231
  %540 = vmatpush1.bf16.msra.mxu0 %v230
  %541 = vmatprep.subr.bf16.mxu0 %v233
  %542 = vmatpush1.bf16.msra.mxu0 %v232
  %543 = vmatprep.subr.bf16.mxu0 %v235
  %544 = vmatpush1.bf16.msra.mxu0 %v234
  %545 = vmatprep.subr.bf16.mxu0 %v237
  %546 = vmatpush1.bf16.msra.mxu0 %v236
  %547 = vmatprep.subr.bf16.mxu0 %v239
  %548 = vmatpush1.bf16.msra.mxu0 %v238
  %549 = vmatprep.subr.bf16.mxu0 %v241
  %550 = vmatpush1.bf16.msra.mxu0 %v240
  %551 = vmatprep.subr.bf16.mxu0 %v243
  %552 = vmatpush1.bf16.msra.mxu0 %v242
  %553 = vmatprep.subr.bf16.mxu0 %v245
  %554 = vmatpush1.bf16.msra.mxu0 %v244
  %555 = vmatprep.subr.bf16.mxu0 %v247
  %556 = vmatpush1.bf16.msra.mxu0 %v246
  %557 = vmatprep.subr.bf16.mxu0 %v249
  %558 = vmatpush1.bf16.msra.mxu0 %v248
  %559 = vmatprep.subr.bf16.mxu0 %v251
  %560 = vmatpush1.bf16.msra.mxu0 %v250
  %561 = vmatprep.mubr.bf16.mxu0 %v496
  %562 = vmatmul.mubr.bf16.gmra.mrb[0].mxu0 %v495
  %v563 = vpop.f32.mrb[0].mxu0
  %v564 = vadd.f32 0.0, %v563
  %v565 = vpop.f32.mrb[0].mxu0
  %v566 = vadd.f32 0.0, %v565
  %v567 = vpop.f32.mrb[0].mxu0
  %v568 = vadd.f32 0.0, %v567
  %v569 = vpop.f32.mrb[0].mxu0
  %v570 = vadd.f32 0.0, %v569
  %571 = vmatprep.mubr.bf16.mxu0 %v498
  %572 = vmatmul.mubr.bf16.gmra.mrb[0].mxu0 %v497
  %v573 = vpop.f32.mrb[0].mxu0
  %v574 = vadd.f32 0.0, %v573
  %v575 = vpop.f32.mrb[0].mxu0
  %v576 = vadd.f32 0.0, %v575
  %v577 = vpop.f32.mrb[0].mxu0
  %v578 = vadd.f32 0.0, %v577
  %v579 = vpop.f32.mrb[0].mxu0
  %v580 = vadd.f32 0.0, %v579
  %581 = vmatprep.mubr.bf16.mxu0 %v500
  %582 = vmatmul.mubr.bf16.gmra.mrb[0].mxu0 %v499
  %v583 = vpop.f32.mrb[0].mxu0
  %v584 = vadd.f32 0.0, %v583
  %v585 = vpop.f32.mrb[0].mxu0
  %v586 = vadd.f32 0.0, %v585
  %v587 = vpop.f32.mrb[0].mxu0
  %v588 = vadd.f32 0.0, %v587
  %v589 = vpop.f32.mrb[0].mxu0
  %v590 = vadd.f32 0.0, %v589
  %591 = vmatprep.mubr.bf16.mxu0 %v502
  %592 = vmatmul.mubr.bf16.gmra.mrb[0].mxu0 %v501
  %v593 = vpop.f32.mrb[0].mxu0
  %v594 = vadd.f32 0.0, %v593
  %v595 = vpop.f32.mrb[0].mxu0
  %v596 = vadd.f32 0.0, %v595
  %v597 = vpop.f32.mrb[0].mxu0
  %v598 = vadd.f32 0.0, %v597
  %v599 = vpop.f32.mrb[0].mxu0
  %v600 = vadd.f32 0.0, %v599
  %601 = vdwg.mxu0
  %v602 = vadd.f32 %v513, %v564
  %v603 = vadd.f32 %v514, %v566
  %v604 = vadd.f32 %v515, %v568
  %v605 = vadd.f32 %v516, %v570
  %v606 = vadd.f32 %v517, %v574
  %v607 = vadd.f32 %v518, %v576
  %v608 = vadd.f32 %v519, %v578
  %v609 = vadd.f32 %v520, %v580
  %v610 = vadd.f32 %v521, %v584
  %v611 = vadd.f32 %v522, %v586
  %v612 = vadd.f32 %v523, %v588
  %v613 = vadd.f32 %v524, %v590
  %v614 = vadd.f32 %v525, %v594
  %v615 = vadd.f32 %v526, %v596
  %v616 = vadd.f32 %v527, %v598
  %v617 = vadd.f32 %v528, %v600
  %v618 = vpack.c.bf16 %v604, %v602
  %v619 = vpack.c.bf16 %v605, %v603
  %v620 = vpack.c.bf16 %v608, %v606
  %v621 = vpack.c.bf16 %v609, %v607
  %v622 = vpack.c.bf16 %v612, %v610
  %v623 = vpack.c.bf16 %v613, %v611
  %v624 = vpack.c.bf16 %v616, %v614
  %v625 = vpack.c.bf16 %v617, %v615
  %s626 = scalar_lea.vmem %s3, 128
  %627 = vst [vmem:[%s626] sm:$0xff] %v618
  %628 = vst [vmem:[%s626 + $0x8] sm:$0xff] %v619
  %629 = vst [vmem:[%s626 + $0x10] sm:$0xff] %v620
  %630 = vst [vmem:[%s626 + $0x18] sm:$0xff] %v621
  %631 = vst [vmem:[%s626 + $0x20] sm:$0xff] %v622
  %632 = vst [vmem:[%s626 + $0x28] sm:$0xff] %v623
  %633 = vst [vmem:[%s626 + $0x30] sm:$0xff] %v624
  %634 = vst [vmem:[%s626 + $0x38] sm:$0xff] %v625
  %s635 = scalar_lea.vmem %s0, 384
  %v636 = vld [vmem:[%s635] sm:$0xff]
  %v637 = vld [vmem:[%s635 + $0x8] sm:$0xff]
  %v638 = vld [vmem:[%s635 + $0x10] sm:$0xff]
  %v639 = vld [vmem:[%s635 + $0x18] sm:$0xff]
  %v640 = vld [vmem:[%s635 + $0x20] sm:$0xff]
  %v641 = vld [vmem:[%s635 + $0x28] sm:$0xff]
  %v642 = vld [vmem:[%s635 + $0x30] sm:$0xff]
  %v643 = vld [vmem:[%s635 + $0x38] sm:$0xff]
  %v644 = vld [vmem:[%s635 + $0x40] sm:$0xff]
  %v645 = vld [vmem:[%s635 + $0x48] sm:$0xff]
  %v646 = vld [vmem:[%s635 + $0x50] sm:$0xff]
  %v647 = vld [vmem:[%s635 + $0x58] sm:$0xff]
  %v648 = vld [vmem:[%s635 + $0x60] sm:$0xff]
  %v649 = vld [vmem:[%s635 + $0x68] sm:$0xff]
  %v650 = vld [vmem:[%s635 + $0x70] sm:$0xff]
  %v651 = vld [vmem:[%s635 + $0x78] sm:$0xff]
  %652 = vmatprep.subr.bf16.mxu0 %v221
  %653 = vmatpush1.bf16.msra.mxu0 %v220
  %654 = vmatprep.subr.bf16.mxu0 %v223
  %655 = vmatpush1.bf16.msra.mxu0 %v222
  %656 = vmatprep.subr.bf16.mxu0 %v225
  %657 = vmatpush1.bf16.msra.mxu0 %v224
  %658 = vmatprep.subr.bf16.mxu0 %v227
  %659 = vmatpush1.bf16.msra.mxu0 %v226
  %660 = vmatprep.subr.bf16.mxu0 %v229
  %661 = vmatpush1.bf16.msra.mxu0 %v228
  %662 = vmatprep.subr.bf16.mxu0 %v231
  %663 = vmatpush1.bf16.msra.mxu0 %v230
  %664 = vmatprep.subr.bf16.mxu0 %v233
  %665 = vmatpush1.bf16.msra.mxu0 %v232
  %666 = vmatprep.subr.bf16.mxu0 %v235
  %667 = vmatpush1.bf16.msra.mxu0 %v234
  %668 = vmatprep.subr.bf16.mxu0 %v237
  %669 = vmatpush1.bf16.msra.mxu0 %v236
  %670 = vmatprep.subr.bf16.mxu0 %v239
  %671 = vmatpush1.bf16.msra.mxu0 %v238
  %672 = vmatprep.subr.bf16.mxu0 %v241
  %673 = vmatpush1.bf16.msra.mxu0 %v240
  %674 = vmatprep.subr.bf16.mxu0 %v243
  %675 = vmatpush1.bf16.msra.mxu0 %v242
  %676 = vmatprep.subr.bf16.mxu0 %v245
  %677 = vmatpush1.bf16.msra.mxu0 %v244
  %678 = vmatprep.subr.bf16.mxu0 %v247
  %679 = vmatpush1.bf16.msra.mxu0 %v246
  %680 = vmatprep.subr.bf16.mxu0 %v249
  %681 = vmatpush1.bf16.msra.mxu0 %v248
  %682 = vmatprep.subr.bf16.mxu0 %v251
  %683 = vmatpush1.bf16.msra.mxu0 %v250
  %684 = vmatprep.mubr.bf16.mxu0 %v619
  %685 = vmatmul.mubr.bf16.gmra.mrb[0].mxu0 %v618
  %v686 = vpop.f32.mrb[0].mxu0
  %v687 = vadd.f32 0.0, %v686
  %v688 = vpop.f32.mrb[0].mxu0
  %v689 = vadd.f32 0.0, %v688
  %v690 = vpop.f32.mrb[0].mxu0
  %v691 = vadd.f32 0.0, %v690
  %v692 = vpop.f32.mrb[0].mxu0
  %v693 = vadd.f32 0.0, %v692
  %694 = vmatprep.mubr.bf16.mxu0 %v621
  %695 = vmatmul.mubr.bf16.gmra.mrb[0].mxu0 %v620
  %v696 = vpop.f32.mrb[0].mxu0
  %v697 = vadd.f32 0.0, %v696
  %v698 = vpop.f32.mrb[0].mxu0
  %v699 = vadd.f32 0.0, %v698
  %v700 = vpop.f32.mrb[0].mxu0
  %v701 = vadd.f32 0.0, %v700
  %v702 = vpop.f32.mrb[0].mxu0
  %v703 = vadd.f32 0.0, %v702
  %704 = vmatprep.mubr.bf16.mxu0 %v623
  %705 = vmatmul.mubr.bf16.gmra.mrb[0].mxu0 %v622
  %v706 = vpop.f32.mrb[0].mxu0
  %v707 = vadd.f32 0.0, %v706
  %v708 = vpop.f32.mrb[0].mxu0
  %v709 = vadd.f32 0.0, %v708
  %v710 = vpop.f32.mrb[0].mxu0
  %v711 = vadd.f32 0.0, %v710
  %v712 = vpop.f32.mrb[0].mxu0
  %v713 = vadd.f32 0.0, %v712
  %714 = vmatprep.mubr.bf16.mxu0 %v625
  %715 = vmatmul.mubr.bf16.gmra.mrb[0].mxu0 %v624
  %v716 = vpop.f32.mrb[0].mxu0
  %v717 = vadd.f32 0.0, %v716
  %v718 = vpop.f32.mrb[0].mxu0
  %v719 = vadd.f32 0.0, %v718
  %v720 = vpop.f32.mrb[0].mxu0
  %v721 = vadd.f32 0.0, %v720
  %v722 = vpop.f32.mrb[0].mxu0
  %v723 = vadd.f32 0.0, %v722
  %724 = vdwg.mxu0
  %v725 = vadd.f32 %v636, %v687
  %v726 = vadd.f32 %v637, %v689
  %v727 = vadd.f32 %v638, %v691
  %v728 = vadd.f32 %v639, %v693
  %v729 = vadd.f32 %v640, %v697
  %v730 = vadd.f32 %v641, %v699
  %v731 = vadd.f32 %v642, %v701
  %v732 = vadd.f32 %v643, %v703
  %v733 = vadd.f32 %v644, %v707
  %v734 = vadd.f32 %v645, %v709
  %v735 = vadd.f32 %v646, %v711
  %v736 = vadd.f32 %v647, %v713
  %v737 = vadd.f32 %v648, %v717
  %v738 = vadd.f32 %v649, %v719
  %v739 = vadd.f32 %v650, %v721
  %v740 = vadd.f32 %v651, %v723
  %v741 = vpack.c.bf16 %v727, %v725
  %v742 = vpack.c.bf16 %v728, %v726
  %v743 = vpack.c.bf16 %v731, %v729
  %v744 = vpack.c.bf16 %v732, %v730
  %v745 = vpack.c.bf16 %v735, %v733
  %v746 = vpack.c.bf16 %v736, %v734
  %v747 = vpack.c.bf16 %v739, %v737
  %v748 = vpack.c.bf16 %v740, %v738
  %s749 = scalar_lea.vmem %s3, 192
  %750 = vst [vmem:[%s749] sm:$0xff] %v741
  %751 = vst [vmem:[%s749 + $0x8] sm:$0xff] %v742
  %752 = vst [vmem:[%s749 + $0x10] sm:$0xff] %v743
  %753 = vst [vmem:[%s749 + $0x18] sm:$0xff] %v744
  %754 = vst [vmem:[%s749 + $0x20] sm:$0xff] %v745
  %755 = vst [vmem:[%s749 + $0x28] sm:$0xff] %v746
  %756 = vst [vmem:[%s749 + $0x30] sm:$0xff] %v747
  %757 = vst [vmem:[%s749 + $0x38] sm:$0xff] %v748
  %s758 = scalar_lea.vmem %s0, 512
  %v759 = vld [vmem:[%s758] sm:$0xff]
  %v760 = vld [vmem:[%s758 + $0x8] sm:$0xff]
  %v761 = vld [vmem:[%s758 + $0x10] sm:$0xff]
  %v762 = vld [vmem:[%s758 + $0x18] sm:$0xff]
  %v763 = vld [vmem:[%s758 + $0x20] sm:$0xff]
  %v764 = vld [vmem:[%s758 + $0x28] sm:$0xff]
  %v765 = vld [vmem:[%s758 + $0x30] sm:$0xff]
  %v766 = vld [vmem:[%s758 + $0x38] sm:$0xff]
  %v767 = vld [vmem:[%s758 + $0x40] sm:$0xff]
  %v768 = vld [vmem:[%s758 + $0x48] sm:$0xff]
  %v769 = vld [vmem:[%s758 + $0x50] sm:$0xff]
  %v770 = vld [vmem:[%s758 + $0x58] sm:$0xff]
  %v771 = vld [vmem:[%s758 + $0x60] sm:$0xff]
  %v772 = vld [vmem:[%s758 + $0x68] sm:$0xff]
  %v773 = vld [vmem:[%s758 + $0x70] sm:$0xff]
  %v774 = vld [vmem:[%s758 + $0x78] sm:$0xff]
  %775 = vmatprep.subr.bf16.mxu0 %v221
  %776 = vmatpush1.bf16.msra.mxu0 %v220
  %777 = vmatprep.subr.bf16.mxu0 %v223
  %778 = vmatpush1.bf16.msra.mxu0 %v222
  %779 = vmatprep.subr.bf16.mxu0 %v225
  %780 = vmatpush1.bf16.msra.mxu0 %v224
  %781 = vmatprep.subr.bf16.mxu0 %v227
  %782 = vmatpush1.bf16.msra.mxu0 %v226
  %783 = vmatprep.subr.bf16.mxu0 %v229
  %784 = vmatpush1.bf16.msra.mxu0 %v228
  %785 = vmatprep.subr.bf16.mxu0 %v231
  %786 = vmatpush1.bf16.msra.mxu0 %v230
  %787 = vmatprep.subr.bf16.mxu0 %v233
  %788 = vmatpush1.bf16.msra.mxu0 %v232
  %789 = vmatprep.subr.bf16.mxu0 %v235
  %790 = vmatpush1.bf16.msra.mxu0 %v234
  %791 = vmatprep.subr.bf16.mxu0 %v237
  %792 = vmatpush1.bf16.msra.mxu0 %v236
  %793 = vmatprep.subr.bf16.mxu0 %v239
  %794 = vmatpush1.bf16.msra.mxu0 %v238
  %795 = vmatprep.subr.bf16.mxu0 %v241
  %796 = vmatpush1.bf16.msra.mxu0 %v240
  %797 = vmatprep.subr.bf16.mxu0 %v243
  %798 = vmatpush1.bf16.msra.mxu0 %v242
  %799 = vmatprep.subr.bf16.mxu0 %v245
  %800 = vmatpush1.bf16.msra.mxu0 %v244
  %801 = vmatprep.subr.bf16.mxu0 %v247
  %802 = vmatpush1.bf16.msra.mxu0 %v246
  %803 = vmatprep.subr.bf16.mxu0 %v249
  %804 = vmatpush1.bf16.msra.mxu0 %v248
  %805 = vmatprep.subr.bf16.mxu0 %v251
  %806 = vmatpush1.bf16.msra.mxu0 %v250
  %807 = vmatprep.mubr.bf16.mxu0 %v742
  %808 = vmatmul.mubr.bf16.gmra.mrb[0].mxu0 %v741
  %v809 = vpop.f32.mrb[0].mxu0
  %v810 = vadd.f32 0.0, %v809
  %v811 = vpop.f32.mrb[0].mxu0
  %v812 = vadd.f32 0.0, %v811
  %v813 = vpop.f32.mrb[0].mxu0
  %v814 = vadd.f32 0.0, %v813
  %v815 = vpop.f32.mrb[0].mxu0
  %v816 = vadd.f32 0.0, %v815
  %817 = vmatprep.mubr.bf16.mxu0 %v744
  %818 = vmatmul.mubr.bf16.gmra.mrb[0].mxu0 %v743
  %v819 = vpop.f32.mrb[0].mxu0
  %v820 = vadd.f32 0.0, %v819
  %v821 = vpop.f32.mrb[0].mxu0
  %v822 = vadd.f32 0.0, %v821
  %v823 = vpop.f32.mrb[0].mxu0
  %v824 = vadd.f32 0.0, %v823
  %v825 = vpop.f32.mrb[0].mxu0
  %v826 = vadd.f32 0.0, %v825
  %827 = vmatprep.mubr.bf16.mxu0 %v746
  %828 = vmatmul.mubr.bf16.gmra.mrb[0].mxu0 %v745
  %v829 = vpop.f32.mrb[0].mxu0
  %v830 = vadd.f32 0.0, %v829
  %v831 = vpop.f32.mrb[0].mxu0
  %v832 = vadd.f32 0.0, %v831
  %v833 = vpop.f32.mrb[0].mxu0
  %v834 = vadd.f32 0.0, %v833
  %v835 = vpop.f32.mrb[0].mxu0
  %v836 = vadd.f32 0.0, %v835
  %837 = vmatprep.mubr.bf16.mxu0 %v748
  %838 = vmatmul.mubr.bf16.gmra.mrb[0].mxu0 %v747
  %v839 = vpop.f32.mrb[0].mxu0
  %v840 = vadd.f32 0.0, %v839
  %v841 = vpop.f32.mrb[0].mxu0
  %v842 = vadd.f32 0.0, %v841
  %v843 = vpop.f32.mrb[0].mxu0
  %v844 = vadd.f32 0.0, %v843
  %v845 = vpop.f32.mrb[0].mxu0
  %v846 = vadd.f32 0.0, %v845
  %847 = vdwg.mxu0
  %v848 = vadd.f32 %v759, %v810
  %v849 = vadd.f32 %v760, %v812
  %v850 = vadd.f32 %v761, %v814
  %v851 = vadd.f32 %v762, %v816
  %v852 = vadd.f32 %v763, %v820
  %v853 = vadd.f32 %v764, %v822
  %v854 = vadd.f32 %v765, %v824
  %v855 = vadd.f32 %v766, %v826
  %v856 = vadd.f32 %v767, %v830
  %v857 = vadd.f32 %v768, %v832
  %v858 = vadd.f32 %v769, %v834
  %v859 = vadd.f32 %v770, %v836
  %v860 = vadd.f32 %v771, %v840
  %v861 = vadd.f32 %v772, %v842
  %v862 = vadd.f32 %v773, %v844
  %v863 = vadd.f32 %v774, %v846
  %v864 = vpack.c.bf16 %v850, %v848
  %v865 = vpack.c.bf16 %v851, %v849
  %v866 = vpack.c.bf16 %v854, %v852
  %v867 = vpack.c.bf16 %v855, %v853
  %v868 = vpack.c.bf16 %v858, %v856
  %v869 = vpack.c.bf16 %v859, %v857
  %v870 = vpack.c.bf16 %v862, %v860
  %v871 = vpack.c.bf16 %v863, %v861
  %s872 = scalar_lea.vmem %s3, 256
  %873 = vst [vmem:[%s872] sm:$0xff] %v864
  %874 = vst [vmem:[%s872 + $0x8] sm:$0xff] %v865
  %875 = vst [vmem:[%s872 + $0x10] sm:$0xff] %v866
  %876 = vst [vmem:[%s872 + $0x18] sm:$0xff] %v867
  %877 = vst [vmem:[%s872 + $0x20] sm:$0xff] %v868
  %878 = vst [vmem:[%s872 + $0x28] sm:$0xff] %v869
  %879 = vst [vmem:[%s872 + $0x30] sm:$0xff] %v870
  %880 = vst [vmem:[%s872 + $0x38] sm:$0xff] %v871
  %s881 = scalar_lea.vmem %s0, 640
  %v882 = vld [vmem:[%s881] sm:$0xff]
  %v883 = vld [vmem:[%s881 + $0x8] sm:$0xff]
  %v884 = vld [vmem:[%s881 + $0x10] sm:$0xff]
  %v885 = vld [vmem:[%s881 + $0x18] sm:$0xff]
  %v886 = vld [vmem:[%s881 + $0x20] sm:$0xff]
  %v887 = vld [vmem:[%s881 + $0x28] sm:$0xff]
  %v888 = vld [vmem:[%s881 + $0x30] sm:$0xff]
  %v889 = vld [vmem:[%s881 + $0x38] sm:$0xff]
  %v890 = vld [vmem:[%s881 + $0x40] sm:$0xff]
  %v891 = vld [vmem:[%s881 + $0x48] sm:$0xff]
  %v892 = vld [vmem:[%s881 + $0x50] sm:$0xff]
  %v893 = vld [vmem:[%s881 + $0x58] sm:$0xff]
  %v894 = vld [vmem:[%s881 + $0x60] sm:$0xff]
  %v895 = vld [vmem:[%s881 + $0x68] sm:$0xff]
  %v896 = vld [vmem:[%s881 + $0x70] sm:$0xff]
  %v897 = vld [vmem:[%s881 + $0x78] sm:$0xff]
  %898 = vmatprep.subr.bf16.mxu0 %v221
  %899 = vmatpush1.bf16.msra.mxu0 %v220
  %900 = vmatprep.subr.bf16.mxu0 %v223
  %901 = vmatpush1.bf16.msra.mxu0 %v222
  %902 = vmatprep.subr.bf16.mxu0 %v225
  %903 = vmatpush1.bf16.msra.mxu0 %v224
  %904 = vmatprep.subr.bf16.mxu0 %v227
  %905 = vmatpush1.bf16.msra.mxu0 %v226
  %906 = vmatprep.subr.bf16.mxu0 %v229
  %907 = vmatpush1.bf16.msra.mxu0 %v228
  %908 = vmatprep.subr.bf16.mxu0 %v231
  %909 = vmatpush1.bf16.msra.mxu0 %v230
  %910 = vmatprep.subr.bf16.mxu0 %v233
  %911 = vmatpush1.bf16.msra.mxu0 %v232
  %912 = vmatprep.subr.bf16.mxu0 %v235
  %913 = vmatpush1.bf16.msra.mxu0 %v234
  %914 = vmatprep.subr.bf16.mxu0 %v237
  %915 = vmatpush1.bf16.msra.mxu0 %v236
  %916 = vmatprep.subr.bf16.mxu0 %v239
  %917 = vmatpush1.bf16.msra.mxu0 %v238
  %918 = vmatprep.subr.bf16.mxu0 %v241
  %919 = vmatpush1.bf16.msra.mxu0 %v240
  %920 = vmatprep.subr.bf16.mxu0 %v243
  %921 = vmatpush1.bf16.msra.mxu0 %v242
  %922 = vmatprep.subr.bf16.mxu0 %v245
  %923 = vmatpush1.bf16.msra.mxu0 %v244
  %924 = vmatprep.subr.bf16.mxu0 %v247
  %925 = vmatpush1.bf16.msra.mxu0 %v246
  %926 = vmatprep.subr.bf16.mxu0 %v249
  %927 = vmatpush1.bf16.msra.mxu0 %v248
  %928 = vmatprep.subr.bf16.mxu0 %v251
  %929 = vmatpush1.bf16.msra.mxu0 %v250
  %930 = vmatprep.mubr.bf16.mxu0 %v865
  %931 = vmatmul.mubr.bf16.gmra.mrb[0].mxu0 %v864
  %v932 = vpop.f32.mrb[0].mxu0
  %v933 = vadd.f32 0.0, %v932
  %v934 = vpop.f32.mrb[0].mxu0
  %v935 = vadd.f32 0.0, %v934
  %v936 = vpop.f32.mrb[0].mxu0
  %v937 = vadd.f32 0.0, %v936
  %v938 = vpop.f32.mrb[0].mxu0
  %v939 = vadd.f32 0.0, %v938
  %940 = vmatprep.mubr.bf16.mxu0 %v867
  %941 = vmatmul.mubr.bf16.gmra.mrb[0].mxu0 %v866
  %v942 = vpop.f32.mrb[0].mxu0
  %v943 = vadd.f32 0.0, %v942
  %v944 = vpop.f32.mrb[0].mxu0
  %v945 = vadd.f32 0.0, %v944
  %v946 = vpop.f32.mrb[0].mxu0
  %v947 = vadd.f32 0.0, %v946
  %v948 = vpop.f32.mrb[0].mxu0
  %v949 = vadd.f32 0.0, %v948
  %950 = vmatprep.mubr.bf16.mxu0 %v869
  %951 = vmatmul.mubr.bf16.gmra.mrb[0].mxu0 %v868
  %v952 = vpop.f32.mrb[0].mxu0
  %v953 = vadd.f32 0.0, %v952
  %v954 = vpop.f32.mrb[0].mxu0
  %v955 = vadd.f32 0.0, %v954
  %v956 = vpop.f32.mrb[0].mxu0
  %v957 = vadd.f32 0.0, %v956
  %v958 = vpop.f32.mrb[0].mxu0
  %v959 = vadd.f32 0.0, %v958
  %960 = vmatprep.mubr.bf16.mxu0 %v871
  %961 = vmatmul.mubr.bf16.gmra.mrb[0].mxu0 %v870
  %v962 = vpop.f32.mrb[0].mxu0
  %v963 = vadd.f32 0.0, %v962
  %v964 = vpop.f32.mrb[0].mxu0
  %v965 = vadd.f32 0.0, %v964
  %v966 = vpop.f32.mrb[0].mxu0
  %v967 = vadd.f32 0.0, %v966
  %v968 = vpop.f32.mrb[0].mxu0
  %v969 = vadd.f32 0.0, %v968
  %970 = vdwg.mxu0
  %v971 = vadd.f32 %v882, %v933
  %v972 = vadd.f32 %v883, %v935
  %v973 = vadd.f32 %v884, %v937
  %v974 = vadd.f32 %v885, %v939
  %v975 = vadd.f32 %v886, %v943
  %v976 = vadd.f32 %v887, %v945
  %v977 = vadd.f32 %v888, %v947
  %v978 = vadd.f32 %v889, %v949
  %v979 = vadd.f32 %v890, %v953
  %v980 = vadd.f32 %v891, %v955
  %v981 = vadd.f32 %v892, %v957
  %v982 = vadd.f32 %v893, %v959
  %v983 = vadd.f32 %v894, %v963
  %v984 = vadd.f32 %v895, %v965
  %v985 = vadd.f32 %v896, %v967
  %v986 = vadd.f32 %v897, %v969
  %v987 = vpack.c.bf16 %v973, %v971
  %v988 = vpack.c.bf16 %v974, %v972
  %v989 = vpack.c.bf16 %v977, %v975
  %v990 = vpack.c.bf16 %v978, %v976
  %v991 = vpack.c.bf16 %v981, %v979
  %v992 = vpack.c.bf16 %v982, %v980
  %v993 = vpack.c.bf16 %v985, %v983
  %v994 = vpack.c.bf16 %v986, %v984
  %s995 = scalar_lea.vmem %s3, 320
  %996 = vst [vmem:[%s995] sm:$0xff] %v987
  %997 = vst [vmem:[%s995 + $0x8] sm:$0xff] %v988
  %998 = vst [vmem:[%s995 + $0x10] sm:$0xff] %v989
  %999 = vst [vmem:[%s995 + $0x18] sm:$0xff] %v990
  %1000 = vst [vmem:[%s995 + $0x20] sm:$0xff] %v991
  %1001 = vst [vmem:[%s995 + $0x28] sm:$0xff] %v992
  %1002 = vst [vmem:[%s995 + $0x30] sm:$0xff] %v993
  %1003 = vst [vmem:[%s995 + $0x38] sm:$0xff] %v994
  %s1004 = scalar_lea.vmem %s0, 768
  %v1005 = vld [vmem:[%s1004] sm:$0xff]
  %v1006 = vld [vmem:[%s1004 + $0x8] sm:$0xff]
  %v1007 = vld [vmem:[%s1004 + $0x10] sm:$0xff]
  %v1008 = vld [vmem:[%s1004 + $0x18] sm:$0xff]
  %v1009 = vld [vmem:[%s1004 + $0x20] sm:$0xff]
  %v1010 = vld [vmem:[%s1004 + $0x28] sm:$0xff]
  %v1011 = vld [vmem:[%s1004 + $0x30] sm:$0xff]
  %v1012 = vld [vmem:[%s1004 + $0x38] sm:$0xff]
  %v1013 = vld [vmem:[%s1004 + $0x40] sm:$0xff]
  %v1014 = vld [vmem:[%s1004 + $0x48] sm:$0xff]
  %v1015 = vld [vmem:[%s1004 + $0x50] sm:$0xff]
  %v1016 = vld [vmem:[%s1004 + $0x58] sm:$0xff]
  %v1017 = vld [vmem:[%s1004 + $0x60] sm:$0xff]
  %v1018 = vld [vmem:[%s1004 + $0x68] sm:$0xff]
  %v1019 = vld [vmem:[%s1004 + $0x70] sm:$0xff]
  %v1020 = vld [vmem:[%s1004 + $0x78] sm:$0xff]
  %1021 = vmatprep.subr.bf16.mxu0 %v221
  %1022 = vmatpush1.bf16.msra.mxu0 %v220
  %1023 = vmatprep.subr.bf16.mxu0 %v223
  %1024 = vmatpush1.bf16.msra.mxu0 %v222
  %1025 = vmatprep.subr.bf16.mxu0 %v225
  %1026 = vmatpush1.bf16.msra.mxu0 %v224
  %1027 = vmatprep.subr.bf16.mxu0 %v227
  %1028 = vmatpush1.bf16.msra.mxu0 %v226
  %1029 = vmatprep.subr.bf16.mxu0 %v229
  %1030 = vmatpush1.bf16.msra.mxu0 %v228
  %1031 = vmatprep.subr.bf16.mxu0 %v231
  %1032 = vmatpush1.bf16.msra.mxu0 %v230
  %1033 = vmatprep.subr.bf16.mxu0 %v233
  %1034 = vmatpush1.bf16.msra.mxu0 %v232
  %1035 = vmatprep.subr.bf16.mxu0 %v235
  %1036 = vmatpush1.bf16.msra.mxu0 %v234
  %1037 = vmatprep.subr.bf16.mxu0 %v237
  %1038 = vmatpush1.bf16.msra.mxu0 %v236
  %1039 = vmatprep.subr.bf16.mxu0 %v239
  %1040 = vmatpush1.bf16.msra.mxu0 %v238
  %1041 = vmatprep.subr.bf16.mxu0 %v241
  %1042 = vmatpush1.bf16.msra.mxu0 %v240
  %1043 = vmatprep.subr.bf16.mxu0 %v243
  %1044 = vmatpush1.bf16.msra.mxu0 %v242
  %1045 = vmatprep.subr.bf16.mxu0 %v245
  %1046 = vmatpush1.bf16.msra.mxu0 %v244
  %1047 = vmatprep.subr.bf16.mxu0 %v247
  %1048 = vmatpush1.bf16.msra.mxu0 %v246
  %1049 = vmatprep.subr.bf16.mxu0 %v249
  %1050 = vmatpush1.bf16.msra.mxu0 %v248
  %1051 = vmatprep.subr.bf16.mxu0 %v251
  %1052 = vmatpush1.bf16.msra.mxu0 %v250
  %1053 = vmatprep.mubr.bf16.mxu0 %v988
  %1054 = vmatmul.mubr.bf16.gmra.mrb[0].mxu0 %v987
  %v1055 = vpop.f32.mrb[0].mxu0
  %v1056 = vadd.f32 0.0, %v1055
  %v1057 = vpop.f32.mrb[0].mxu0
  %v1058 = vadd.f32 0.0, %v1057
  %v1059 = vpop.f32.mrb[0].mxu0
  %v1060 = vadd.f32 0.0, %v1059
  %v1061 = vpop.f32.mrb[0].mxu0
  %v1062 = vadd.f32 0.0, %v1061
  %1063 = vmatprep.mubr.bf16.mxu0 %v990
  %1064 = vmatmul.mubr.bf16.gmra.mrb[0].mxu0 %v989
  %v1065 = vpop.f32.mrb[0].mxu0
  %v1066 = vadd.f32 0.0, %v1065
  %v1067 = vpop.f32.mrb[0].mxu0
  %v1068 = vadd.f32 0.0, %v1067
  %v1069 = vpop.f32.mrb[0].mxu0
  %v1070 = vadd.f32 0.0, %v1069
  %v1071 = vpop.f32.mrb[0].mxu0
  %v1072 = vadd.f32 0.0, %v1071
  %1073 = vmatprep.mubr.bf16.mxu0 %v992
  %1074 = vmatmul.mubr.bf16.gmra.mrb[0].mxu0 %v991
  %v1075 = vpop.f32.mrb[0].mxu0
  %v1076 = vadd.f32 0.0, %v1075
  %v1077 = vpop.f32.mrb[0].mxu0
  %v1078 = vadd.f32 0.0, %v1077
  %v1079 = vpop.f32.mrb[0].mxu0
  %v1080 = vadd.f32 0.0, %v1079
  %v1081 = vpop.f32.mrb[0].mxu0
  %v1082 = vadd.f32 0.0, %v1081
  %1083 = vmatprep.mubr.bf16.mxu0 %v994
  %1084 = vmatmul.mubr.bf16.gmra.mrb[0].mxu0 %v993
  %v1085 = vpop.f32.mrb[0].mxu0
  %v1086 = vadd.f32 0.0, %v1085
  %v1087 = vpop.f32.mrb[0].mxu0
  %v1088 = vadd.f32 0.0, %v1087
  %v1089 = vpop.f32.mrb[0].mxu0
  %v1090 = vadd.f32 0.0, %v1089
  %v1091 = vpop.f32.mrb[0].mxu0
  %v1092 = vadd.f32 0.0, %v1091
  %1093 = vdwg.mxu0
  %v1094 = vadd.f32 %v1005, %v1056
  %v1095 = vadd.f32 %v1006, %v1058
  %v1096 = vadd.f32 %v1007, %v1060
  %v1097 = vadd.f32 %v1008, %v1062
  %v1098 = vadd.f32 %v1009, %v1066
  %v1099 = vadd.f32 %v1010, %v1068
  %v1100 = vadd.f32 %v1011, %v1070
  %v1101 = vadd.f32 %v1012, %v1072
  %v1102 = vadd.f32 %v1013, %v1076
  %v1103 = vadd.f32 %v1014, %v1078
  %v1104 = vadd.f32 %v1015, %v1080
  %v1105 = vadd.f32 %v1016, %v1082
  %v1106 = vadd.f32 %v1017, %v1086
  %v1107 = vadd.f32 %v1018, %v1088
  %v1108 = vadd.f32 %v1019, %v1090
  %v1109 = vadd.f32 %v1020, %v1092
  %v1110 = vpack.c.bf16 %v1096, %v1094
  %v1111 = vpack.c.bf16 %v1097, %v1095
  %v1112 = vpack.c.bf16 %v1100, %v1098
  %v1113 = vpack.c.bf16 %v1101, %v1099
  %v1114 = vpack.c.bf16 %v1104, %v1102
  %v1115 = vpack.c.bf16 %v1105, %v1103
  %v1116 = vpack.c.bf16 %v1108, %v1106
  %v1117 = vpack.c.bf16 %v1109, %v1107
  %s1118 = scalar_lea.vmem %s3, 384
  %1119 = vst [vmem:[%s1118] sm:$0xff] %v1110
  %1120 = vst [vmem:[%s1118 + $0x8] sm:$0xff] %v1111
  %1121 = vst [vmem:[%s1118 + $0x10] sm:$0xff] %v1112
  %1122 = vst [vmem:[%s1118 + $0x18] sm:$0xff] %v1113
  %1123 = vst [vmem:[%s1118 + $0x20] sm:$0xff] %v1114
  %1124 = vst [vmem:[%s1118 + $0x28] sm:$0xff] %v1115
  %1125 = vst [vmem:[%s1118 + $0x30] sm:$0xff] %v1116
  %1126 = vst [vmem:[%s1118 + $0x38] sm:$0xff] %v1117
  %s1127 = scalar_lea.vmem %s0, 896
  %v1128 = vld [vmem:[%s1127] sm:$0xff]
  %v1129 = vld [vmem:[%s1127 + $0x8] sm:$0xff]
  %v1130 = vld [vmem:[%s1127 + $0x10] sm:$0xff]
  %v1131 = vld [vmem:[%s1127 + $0x18] sm:$0xff]
  %v1132 = vld [vmem:[%s1127 + $0x20] sm:$0xff]
  %v1133 = vld [vmem:[%s1127 + $0x28] sm:$0xff]
  %v1134 = vld [vmem:[%s1127 + $0x30] sm:$0xff]
  %v1135 = vld [vmem:[%s1127 + $0x38] sm:$0xff]
  %v1136 = vld [vmem:[%s1127 + $0x40] sm:$0xff]
  %v1137 = vld [vmem:[%s1127 + $0x48] sm:$0xff]
  %v1138 = vld [vmem:[%s1127 + $0x50] sm:$0xff]
  %v1139 = vld [vmem:[%s1127 + $0x58] sm:$0xff]
  %v1140 = vld [vmem:[%s1127 + $0x60] sm:$0xff]
  %v1141 = vld [vmem:[%s1127 + $0x68] sm:$0xff]
  %v1142 = vld [vmem:[%s1127 + $0x70] sm:$0xff]
  %v1143 = vld [vmem:[%s1127 + $0x78] sm:$0xff]
  %1144 = vmatprep.subr.bf16.mxu0 %v221
  %1145 = vmatpush1.bf16.msra.mxu0 %v220
  %1146 = vmatprep.subr.bf16.mxu0 %v223
  %1147 = vmatpush1.bf16.msra.mxu0 %v222
  %1148 = vmatprep.subr.bf16.mxu0 %v225
  %1149 = vmatpush1.bf16.msra.mxu0 %v224
  %1150 = vmatprep.subr.bf16.mxu0 %v227
  %1151 = vmatpush1.bf16.msra.mxu0 %v226
  %1152 = vmatprep.subr.bf16.mxu0 %v229
  %1153 = vmatpush1.bf16.msra.mxu0 %v228
  %1154 = vmatprep.subr.bf16.mxu0 %v231
  %1155 = vmatpush1.bf16.msra.mxu0 %v230
  %1156 = vmatprep.subr.bf16.mxu0 %v233
  %1157 = vmatpush1.bf16.msra.mxu0 %v232
  %1158 = vmatprep.subr.bf16.mxu0 %v235
  %1159 = vmatpush1.bf16.msra.mxu0 %v234
  %1160 = vmatprep.subr.bf16.mxu0 %v237
  %1161 = vmatpush1.bf16.msra.mxu0 %v236
  %1162 = vmatprep.subr.bf16.mxu0 %v239
  %1163 = vmatpush1.bf16.msra.mxu0 %v238
  %1164 = vmatprep.subr.bf16.mxu0 %v241
  %1165 = vmatpush1.bf16.msra.mxu0 %v240
  %1166 = vmatprep.subr.bf16.mxu0 %v243
  %1167 = vmatpush1.bf16.msra.mxu0 %v242
  %1168 = vmatprep.subr.bf16.mxu0 %v245
  %1169 = vmatpush1.bf16.msra.mxu0 %v244
  %1170 = vmatprep.subr.bf16.mxu0 %v247
  %1171 = vmatpush1.bf16.msra.mxu0 %v246
  %1172 = vmatprep.subr.bf16.mxu0 %v249
  %1173 = vmatpush1.bf16.msra.mxu0 %v248
  %1174 = vmatprep.subr.bf16.mxu0 %v251
  %1175 = vmatpush1.bf16.msra.mxu0 %v250
  %1176 = vmatprep.mubr.bf16.mxu0 %v1111
  %1177 = vmatmul.mubr.bf16.gmra.mrb[0].mxu0 %v1110
  %v1178 = vpop.f32.mrb[0].mxu0
  %v1179 = vadd.f32 0.0, %v1178
  %v1180 = vpop.f32.mrb[0].mxu0
  %v1181 = vadd.f32 0.0, %v1180
  %v1182 = vpop.f32.mrb[0].mxu0
  %v1183 = vadd.f32 0.0, %v1182
  %v1184 = vpop.f32.mrb[0].mxu0
  %v1185 = vadd.f32 0.0, %v1184
  %1186 = vmatprep.mubr.bf16.mxu0 %v1113
  %1187 = vmatmul.mubr.bf16.gmra.mrb[0].mxu0 %v1112
  %v1188 = vpop.f32.mrb[0].mxu0
  %v1189 = vadd.f32 0.0, %v1188
  %v1190 = vpop.f32.mrb[0].mxu0
  %v1191 = vadd.f32 0.0, %v1190
  %v1192 = vpop.f32.mrb[0].mxu0
  %v1193 = vadd.f32 0.0, %v1192
  %v1194 = vpop.f32.mrb[0].mxu0
  %v1195 = vadd.f32 0.0, %v1194
  %1196 = vmatprep.mubr.bf16.mxu0 %v1115
  %1197 = vmatmul.mubr.bf16.gmra.mrb[0].mxu0 %v1114
  %v1198 = vpop.f32.mrb[0].mxu0
  %v1199 = vadd.f32 0.0, %v1198
  %v1200 = vpop.f32.mrb[0].mxu0
  %v1201 = vadd.f32 0.0, %v1200
  %v1202 = vpop.f32.mrb[0].mxu0
  %v1203 = vadd.f32 0.0, %v1202
  %v1204 = vpop.f32.mrb[0].mxu0
  %v1205 = vadd.f32 0.0, %v1204
  %1206 = vmatprep.mubr.bf16.mxu0 %v1117
  %1207 = vmatmul.mubr.bf16.gmra.mrb[0].mxu0 %v1116
  %v1208 = vpop.f32.mrb[0].mxu0
  %v1209 = vadd.f32 0.0, %v1208
  %v1210 = vpop.f32.mrb[0].mxu0
  %v1211 = vadd.f32 0.0, %v1210
  %v1212 = vpop.f32.mrb[0].mxu0
  %v1213 = vadd.f32 0.0, %v1212
  %v1214 = vpop.f32.mrb[0].mxu0
  %v1215 = vadd.f32 0.0, %v1214
  %1216 = vdwg.mxu0
  %v1217 = vadd.f32 %v1128, %v1179
  %v1218 = vadd.f32 %v1129, %v1181
  %v1219 = vadd.f32 %v1130, %v1183
  %v1220 = vadd.f32 %v1131, %v1185
  %v1221 = vadd.f32 %v1132, %v1189
  %v1222 = vadd.f32 %v1133, %v1191
  %v1223 = vadd.f32 %v1134, %v1193
  %v1224 = vadd.f32 %v1135, %v1195
  %v1225 = vadd.f32 %v1136, %v1199
  %v1226 = vadd.f32 %v1137, %v1201
  %v1227 = vadd.f32 %v1138, %v1203
  %v1228 = vadd.f32 %v1139, %v1205
  %v1229 = vadd.f32 %v1140, %v1209
  %v1230 = vadd.f32 %v1141, %v1211
  %v1231 = vadd.f32 %v1142, %v1213
  %v1232 = vadd.f32 %v1143, %v1215
  %v1233 = vpack.c.bf16 %v1219, %v1217
  %v1234 = vpack.c.bf16 %v1220, %v1218
  %v1235 = vpack.c.bf16 %v1223, %v1221
  %v1236 = vpack.c.bf16 %v1224, %v1222
  %v1237 = vpack.c.bf16 %v1227, %v1225
  %v1238 = vpack.c.bf16 %v1228, %v1226
  %v1239 = vpack.c.bf16 %v1231, %v1229
  %v1240 = vpack.c.bf16 %v1232, %v1230
  %s1241 = scalar_lea.vmem %s3, 448
  %1242 = vst [vmem:[%s1241] sm:$0xff] %v1233
  %1243 = vst [vmem:[%s1241 + $0x8] sm:$0xff] %v1234
  %1244 = vst [vmem:[%s1241 + $0x10] sm:$0xff] %v1235
  %1245 = vst [vmem:[%s1241 + $0x18] sm:$0xff] %v1236
  %1246 = vst [vmem:[%s1241 + $0x20] sm:$0xff] %v1237
  %1247 = vst [vmem:[%s1241 + $0x28] sm:$0xff] %v1238
  %1248 = vst [vmem:[%s1241 + $0x30] sm:$0xff] %v1239
  %1249 = vst [vmem:[%s1241 + $0x38] sm:$0xff] %v1240
  %1250 = vst [vmem:[%s4] sm:$0xff] %v1217
  %1251 = vst [vmem:[%s4 + $0x8] sm:$0xff] %v1218
  %1252 = vst [vmem:[%s4 + $0x10] sm:$0xff] %v1219
  %1253 = vst [vmem:[%s4 + $0x18] sm:$0xff] %v1220
  %1254 = vst [vmem:[%s4 + $0x20] sm:$0xff] %v1221
  %1255 = vst [vmem:[%s4 + $0x28] sm:$0xff] %v1222
  %1256 = vst [vmem:[%s4 + $0x30] sm:$0xff] %v1223
  %1257 = vst [vmem:[%s4 + $0x38] sm:$0xff] %v1224
  %1258 = vst [vmem:[%s4 + $0x40] sm:$0xff] %v1225
  %1259 = vst [vmem:[%s4 + $0x48] sm:$0xff] %v1226
  %1260 = vst [vmem:[%s4 + $0x50] sm:$0xff] %v1227
  %1261 = vst [vmem:[%s4 + $0x58] sm:$0xff] %v1228
  %1262 = vst [vmem:[%s4 + $0x60] sm:$0xff] %v1229
  %1263 = vst [vmem:[%s4 + $0x68] sm:$0xff] %v1230
  %1264 = vst [vmem:[%s4 + $0x70] sm:$0xff] %v1231
  %1265 = vst [vmem:[%s4 + $0x78] sm:$0xff] %v1232
  // Predicated region
  $region18: #{rnn_forward_seq.1} parent=0 // pred_check
    _
  $region19: #{rnn_forward_seq.1} parent=0 // pred_check_branch
    %1267 = sbr.rel (0) target = $region21
  $region20: #{rnn_forward_seq.1} parent=0 // pred_region
    _
  $region21: #{rnn_forward_seq.1} parent=0 // pred_fallthru
    _
  // Predicated region
  $region22: #{rnn_forward_seq.1} parent=0 // pred_check
    _
  $region23: #{rnn_forward_seq.1} parent=0 // pred_check_branch
    %1269 = sbr.rel (0) target = $region25
  $region24: #{rnn_forward_seq.1} parent=0 // pred_region
    _
  $region25: #{rnn_forward_seq.1} parent=0 // pred_fallthru
    _
  // Predicated region
  $region26: #{rnn_forward_seq.1} parent=0 // pred_check
    _
  $region27: #{rnn_forward_seq.1} parent=0 // pred_check_branch
    %1271 = sbr.rel (0) target = $region29
  $region28: #{rnn_forward_seq.1} parent=0 // pred_region
    _
  $region29: #{rnn_forward_seq.1} parent=0 // pred_fallthru
    _
  // Predicated region
  $region30: #{rnn_forward_seq.1} parent=0 // pred_check
    _
  $region31: #{rnn_forward_seq.1} parent=0 // pred_check_branch
    %1273 = sbr.rel (0) target = $region33
  $region32: #{rnn_forward_seq.1} parent=0 // pred_region
    _
  $region33: #{rnn_forward_seq.1} parent=0 // pred_fallthru
    _

</llo_original>
